<compile_context>
chip_gen: v5e
topology: v5e:2x2
jax: 0.10.0
libtpu: 0.0.40
codegen_flags: <defaults>
</compile_context>

<pallas_src>
import functools

import numpy as np

import jax
import jax.numpy as jnp
from jax.experimental import pallas as pl
from jax.experimental.pallas import tpu as pltpu


def _build_conv_matrix(conv_weight, H, W, K, P):
    """Im2col weight matrix for the 2-in / 1-out KxK 'same' conv (zero pad).

    Returns Wmat of shape (2*H*W, H*W) such that, for flattened planes
    avg, mx of shape (..., H*W):
        conv_out = avg @ Wmat[:H*W] + mx @ Wmat[H*W:]
    Out-of-bounds taps are simply absent (zero padding folded in).  Bias-free,
    cross-correlation (PyTorch nn.Conv2d) semantics.
    """
    HW = H * W
    oh, ow, di, dj = np.meshgrid(np.arange(H), np.arange(W),
                                 np.arange(K), np.arange(K), indexing="ij")
    ih, iw = oh + di - P, ow + dj - P
    valid = (ih >= 0) & (ih < H) & (iw >= 0) & (iw < W)
    out_idx = (oh * W + ow)[valid]          # static numpy index arrays
    in_idx = (ih * W + iw)[valid]
    tap_idx = (di * K + dj)[valid]

    w2 = conv_weight.reshape(2, K * K).astype(jnp.float32)  # (avg, max) planes
    wmat = jnp.zeros((2 * HW, HW), jnp.float32)
    for ci in range(2):
        wmat = wmat.at[ci * HW + in_idx, out_idx].add(w2[ci, tap_idx])
    return wmat


def _spatial_attn_kernel(x_ref, w_ref, o_ref, *, C, HW):
    # x_ref: (Bt, C*HW)   input tile (caller dtype), channel-major, lane-dense
    # w_ref: (2*HW, HW)   f32 im2col conv matrix, VMEM-resident across steps
    # o_ref: (Bt, HW)     output tile (caller dtype)
    x0 = x_ref[:, 0:HW].astype(jnp.float32)
    s, m = x0, x0
    # TODO(synk): for large C (real CBAM: 256-1024) move this reduction onto a
    # pipelined channel grid axis ("arbitrary", last) with f32 scratch
    # accumulators finalized via pl.when.
    for c in range(1, C):
        xc = x_ref[:, c * HW:(c + 1) * HW].astype(jnp.float32)
        s = s + xc
        m = jnp.maximum(m, xc)
    avg = s * (1.0 / C)

    # 7x7 'same' conv as MXU contractions (zero-pad mask folded into w_ref).
    acc = jnp.dot(avg, w_ref[0:HW, :],
                  preferred_element_type=jnp.float32,
                  precision=jax.lax.Precision.HIGHEST)
    acc = acc + jnp.dot(m, w_ref[HW:2 * HW, :],
                        preferred_element_type=jnp.float32,
                        precision=jax.lax.Precision.HIGHEST)

    o_ref[:, :] = jax.nn.sigmoid(acc).astype(o_ref.dtype)


def _pick_batch_tile(B, per_b_bytes, fixed_bytes, budget_bytes):
    avail = max(budget_bytes - fixed_bytes, 0)
    fit = int(max(1, min(B, avail // max(per_b_bytes, 1))))
    if fit >= B:
        # Whole batch fits in one step.  Split into >=2 grid steps only when
        # the halves stay sublane-aligned — keeps both v7x TensorCores busy on
        # big batches and costs nothing when memory-bound.
        if B >= 16 and (B // 2) % 8 == 0:
            return B // 2
        return B
    # Largest tile that fits the budget, divides B exactly, and keeps the
    # second-minor block dim a multiple of 8 (TPU (8,128) block rule).
    for cand in range(min(fit, B), 0, -1):
        if B % cand == 0 and cand % 8 == 0:
            return cand
    # TODO(synk): add a reduction grid axis (channel and/or spatial) for shapes
    # where no aligned batch tile fits the budget; single full-batch step now.
    return B


def spatial_attention(x, conv_weight, kernel_size=7):
    """x: (B, C, H, W); conv_weight: (1, 2, K, K) (PyTorch OIHW, no bias).

    Returns sigmoid(conv2d(concat([mean_c(x), max_c(x)], 1), w)), shape
    (B, 1, H, W), in x.dtype — exactly the PyTorch module's forward.
    """
    assert kernel_size in (3, 7)
    B, C, H, W = x.shape
    K = kernel_size
    P = 3 if K == 7 else 1
    assert conv_weight.shape == (1, 2, K, K)
    HW = H * W

    # Lane-dense, sublane-free layout: contiguous (free) reshape only.
    x_flat = x.reshape(B, C * HW)

    # Host-side im2col conv matrix with the zero-pad mask folded in (f32).
    # TODO(synk): for very large H*W (2*HW*HW*4 bytes beyond a few MiB) fall
    # back to a roll-based conv; the matrix path targets typical CBAM maps.
    wmat = _build_conv_matrix(conv_weight, H, W, K, P)       # (2*HW, HW)

    # VMEM accounting (bytes): double-buffered in/out tiles per batch row,
    # f32 working planes, plus the resident weight matrix (x2 for its buffer).
    itemsize = x.dtype.itemsize
    per_b = 2 * C * HW * itemsize + 2 * HW * itemsize + 8 * HW * 4
    fixed = 2 * wmat.size * 4
    budget = 12 << 20            # fits v5e's 16 MiB default scoped VMEM
    Bt = _pick_batch_tile(B, per_b, fixed, budget)
    grid = (B // Bt,)

    kernel = functools.partial(_spatial_attn_kernel, C=C, HW=HW)

    cost = pl.CostEstimate(
        flops=int(B * (2 * C * HW + 2 * 2 * HW * HW)),
        transcendentals=int(B * HW),
        bytes_accessed=int(x_flat.size * itemsize + B * HW * itemsize
                           + wmat.size * 4),
    )

    out = pl.pallas_call(
        kernel,
        out_shape=jax.ShapeDtypeStruct((B, HW), x.dtype),
        grid=grid,
        in_specs=[
            pl.BlockSpec((Bt, C * HW), lambda b: (b, 0)),
            pl.BlockSpec((2 * HW, HW), lambda b: (0, 0)),    # resident weights
        ],
        out_specs=pl.BlockSpec((Bt, HW), lambda b: (b, 0)),
        compiler_params=pltpu.CompilerParams(
            dimension_semantics=("parallel",),
            vmem_limit_bytes=32 << 20,   # >= planned 12 MiB budget on all gens
        ),
        cost_estimate=cost,
    )(x_flat, wmat)

    return out.reshape(B, 1, H, W)


def _reference(x, conv_weight, kernel_size=7):
    P = 3 if kernel_size == 7 else 1
    xf = x.astype(jnp.float32)
    avg = jnp.mean(xf, axis=1, keepdims=True)
    mx = jnp.max(xf, axis=1, keepdims=True)
    feat = jnp.concatenate([avg, mx], axis=1)
    out = jax.lax.conv_general_dilated(
        feat, conv_weight.astype(jnp.float32),
        window_strides=(1, 1),
        padding=[(P, P), (P, P)],
        dimension_numbers=("NCHW", "OIHW", "NCHW"),
        precision=jax.lax.Precision.HIGHEST,
    )
    return jax.nn.sigmoid(out).astype(x.dtype)


if __name__ == "__main__":
    key = jax.random.PRNGKey(0)
    kx, kw = jax.random.split(key)

    B, C, H, W = 2, 4, 16, 16
    K = 7
    x = jax.random.normal(kx, (B, C, H, W), dtype=jnp.float32)

    # Deterministic conv weight init (kaiming-uniform-like bound, fan_in=2*K*K).
    bound = 1.0 / float(np.sqrt(2.0 * K * K))
    conv_w = jax.random.uniform(kw, (1, 2, K, K), dtype=jnp.float32,
                                minval=-bound, maxval=bound)

    out = jax.block_until_ready(spatial_attention(x, conv_w, kernel_size=K))
    ref = jax.block_until_ready(_reference(x, conv_w, kernel_size=K))

    assert out.shape == (B, 1, H, W)
    err = float(jnp.max(jnp.abs(out.astype(jnp.float32) - ref.astype(jnp.float32))))
    # Both paths run the f32 conv at Precision.HIGHEST; tolerance only covers
    # summation-order differences between the MXU contraction and XLA's conv.
    assert err < 1e-4, f"mismatch vs. reference conv: {err}"

    print("KERNEL_OK")
</pallas_src>

<mosaic_0001>
module attributes {stable_mosaic.version = 11 : i64} {
  func.func @_spatial_attn_kernel(%arg0: i32, %arg1: memref<2x1024xf32, #tpu.memory_space<vmem>>, %arg2: memref<512x256xf32, #tpu.memory_space<vmem>>, %arg3: memref<2x256xf32, #tpu.memory_space<vmem>>) attributes {dimension_semantics = [#tpu.dimension_semantics<parallel>], iteration_bounds = array<i64: 1>, scalar_prefetch = 0 : i64, scratch_operands = 0 : i64, tpu.core_type = #tpu.core_type<tc>, window_params = [{transform_indices = @transform_0, window_bounds = array<i64: 2, 1024>}, {pipeline_mode = #tpu.pipeline_mode<synchronous>, transform_indices = @transform_1, window_bounds = array<i64: 512, 256>}, {transform_indices = @transform_2, window_bounds = array<i64: 2, 256>}]} {
    %c0 = arith.constant 0 : index
    %c0_0 = arith.constant 0 : index
    %0 = vector.load %arg1[%c0, %c0_0] : memref<2x1024xf32, #tpu.memory_space<vmem>>, vector<2x256xf32>
    %c0_1 = arith.constant 0 : index
    %c256 = arith.constant 256 : index
    %1 = vector.load %arg1[%c0_1, %c256] : memref<2x1024xf32, #tpu.memory_space<vmem>>, vector<2x256xf32>
    %2 = arith.addf %0, %1 : vector<2x256xf32>
    %3 = arith.maximumf %0, %1 : vector<2x256xf32>
    %c0_2 = arith.constant 0 : index
    %c512 = arith.constant 512 : index
    %4 = vector.load %arg1[%c0_2, %c512] : memref<2x1024xf32, #tpu.memory_space<vmem>>, vector<2x256xf32>
    %5 = arith.addf %2, %4 : vector<2x256xf32>
    %6 = arith.maximumf %3, %4 : vector<2x256xf32>
    %c0_3 = arith.constant 0 : index
    %c768 = arith.constant 768 : index
    %7 = vector.load %arg1[%c0_3, %c768] : memref<2x1024xf32, #tpu.memory_space<vmem>>, vector<2x256xf32>
    %8 = arith.addf %5, %7 : vector<2x256xf32>
    %9 = arith.maximumf %6, %7 : vector<2x256xf32>
    %cst = arith.constant 2.500000e-01 : f32
    %10 = vector.broadcast %cst : f32 to vector<2x256xf32>
    %11 = arith.mulf %8, %10 : vector<2x256xf32>
    %c0_4 = arith.constant 0 : index
    %c0_5 = arith.constant 0 : index
    %12 = vector.load %arg2[%c0_4, %c0_5] : memref<512x256xf32, #tpu.memory_space<vmem>>, vector<256x256xf32>
    %cst_6 = arith.constant dense<0.000000e+00> : vector<2x256xf32>
    %13 = tpu.matmul %11, %12, %cst_6 {dimension_numbers = #tpu.dot_dimension_numbers<[1], [0], [0], [1], [0, 0, 1, 1], [], []>, precision = #tpu.contract_precision<fp32>} : vector<2x256xf32>, vector<256x256xf32>, vector<2x256xf32> -> vector<2x256xf32>
    %c256_7 = arith.constant 256 : index
    %c0_8 = arith.constant 0 : index
    %14 = vector.load %arg2[%c256_7, %c0_8] : memref<512x256xf32, #tpu.memory_space<vmem>>, vector<256x256xf32>
    %cst_9 = arith.constant dense<0.000000e+00> : vector<2x256xf32>
    %15 = tpu.matmul %9, %14, %cst_9 {dimension_numbers = #tpu.dot_dimension_numbers<[1], [0], [0], [1], [0, 0, 1, 1], [], []>, precision = #tpu.contract_precision<fp32>} : vector<2x256xf32>, vector<256x256xf32>, vector<2x256xf32> -> vector<2x256xf32>
    %16 = arith.addf %13, %15 : vector<2x256xf32>
    %17 = arith.negf %16 : vector<2x256xf32>
    %18 = math.exp %17 : vector<2x256xf32>
    %cst_10 = arith.constant 1.000000e+00 : f32
    %19 = vector.broadcast %cst_10 : f32 to vector<2x256xf32>
    %20 = arith.addf %19, %18 : vector<2x256xf32>
    %21 = arith.divf %19, %20 : vector<2x256xf32>
    %c0_11 = arith.constant 0 : index
    %c0_12 = arith.constant 0 : index
    %22 = vector.load %arg3[%c0_11, %c0_12] : memref<2x256xf32, #tpu.memory_space<vmem>>, vector<2x256xf32>
    tpu.vector_store %arg3[%c0_11, %c0_12], %21 {strides = array<i32>} : memref<2x256xf32, #tpu.memory_space<vmem>>, vector<2x256xf32>,
    return
  }
  func.func @transform_0(%arg0: i32) -> (i32, i32) {
    %c0_i32 = arith.constant 0 : i32
    %c0_i32_0 = arith.constant 0 : i32
    return %arg0, %c0_i32 : i32, i32
  }
  func.func @transform_1(%arg0: i32) -> (i32, i32) {
    %c0_i32 = arith.constant 0 : i32
    %c0_i32_0 = arith.constant 0 : i32
    %c0_i32_1 = arith.constant 0 : i32
    return %c0_i32, %c0_i32_0 : i32, i32
  }
  func.func @transform_2(%arg0: i32) -> (i32, i32) {
    %c0_i32 = arith.constant 0 : i32
    %c0_i32_0 = arith.constant 0 : i32
    return %arg0, %c0_i32 : i32, i32
  }
}

</mosaic_0001>

<llo_original>
// kernel: tpu_custom_call.1
$region0: #{tpu_custom_call.1}
  #allocation0 [shape = 'u32[]', space=smem, size = 0x4, offset = 0x4, fixed_abs, tag = 'smem constant byte address 0x4 - core index']
  #allocation1 [shape = 'u32[72,128]{1,0:T(1,128)}', space=vmem, size = 0x9000, scoped, tag = 'internal scratch']
  %s0 = inlined_call_operand.hbm [shape: f32[2,1024], index: 0, kind: input, shape index: {}]
  %s1 = inlined_call_operand.hbm [shape: f32[512,256], index: 1, kind: input, shape index: {}]
  %s2 = inlined_call_operand.hbm [shape: f32[2,256], index: 2, kind: output, shape index: {}]
  %s3 = sld [smem:[#allocation0]]
  $region26: #{tpu_custom_call.1} parent=0
    _
  %s5 = ssub.s32 1, %s3
  %s6 = scalar_select 0, %s5, %s3
  $region1: #{tpu_custom_call.1} parent=0
    #allocation2 [shape = 'u8[8192]{0}', space=vmem, size = 0x2000, scoped, tag = 'input window, operand 0, single buffered']
    #allocation3 [shape = 's32[1]{0}', space=sflag, size = 0x4, scoped, tag = 'scoped memory for tpu_custom_call.1']
    #allocation4 [shape = 's32[1]{0}', space=sflag, size = 0x4, scoped, tag = 'scoped memory for tpu_custom_call.1']
    #allocation5 [shape = 'u8[524288]{0}', space=vmem, size = 0x80000, scoped, tag = 'input window, operand 1, single buffered']
    #allocation6 [shape = 's32[1]{0}', space=sflag, size = 0x4, scoped, tag = 'scoped memory for tpu_custom_call.1']
    #allocation7 [shape = 'u8[2048]{0}', space=vmem, size = 0x800, scoped, tag = 'output window, operand 0, single buffered']
    %7 = vsyncpa [#allocation3], 0
    %8 = vsyncpa [#allocation6], 0
    %9 = vsyncpa [#allocation4], 0
    // Predicated region
    $region2: #{tpu_custom_call.1} parent=1 // pred_check
      _
    $region3: #{tpu_custom_call.1} parent=1 // pred_check_branch
      %11 = sbr.rel (0) target = $region5
    $region4: #{tpu_custom_call.1} parent=1 // pred_region
      %13 = vsyncadd [#allocation3], 0
      %s15 = sshll.u32 %s0, 4
      %s16 = int_to_ptr.hbm [resolvable:$true] %s15
      %s17 = sshll.u32 [#allocation2], 4
      %s18 = int_to_ptr.vmem [resolvable:$true] %s17
      %20 = dma.hbm_to_vmem [thread:$0]  %s16, 256, %s18, [#allocation3]
    $region5: #{tpu_custom_call.1} parent=1 // pred_fallthru
      _
    // Predicated region
    $region6: #{tpu_custom_call.1} parent=1 // pred_check
      _
    $region7: #{tpu_custom_call.1} parent=1 // pred_check_branch
      %22 = sbr.rel (0) target = $region9
    $region8: #{tpu_custom_call.1} parent=1 // pred_region
      %24 = vsyncadd [#allocation6], 0
      %s25 = sshll.u32 %s1, 4
      %s26 = int_to_ptr.hbm [resolvable:$true] %s25
      %s27 = sshll.u32 [#allocation5], 4
      %s28 = int_to_ptr.vmem [resolvable:$true] %s27
      %33 = dma.hbm_to_vmem [thread:$0]  %s26, 16384, %s28, [#allocation6], 256, 256, 16
    $region9: #{tpu_custom_call.1} parent=1 // pred_fallthru
      _
    // Predicated region
    $region10: #{tpu_custom_call.1} parent=1 // pred_check
      _
    $region11: #{tpu_custom_call.1} parent=1 // pred_check_branch
      %35 = sbr.rel (0) target = $region13
    $region12: #{tpu_custom_call.1} parent=1 // pred_region
      %37 = dma.done [#allocation3], 256
    $region13: #{tpu_custom_call.1} parent=1 // pred_fallthru
      _
    // Predicated region
    $region14: #{tpu_custom_call.1} parent=1 // pred_check
      _
    $region15: #{tpu_custom_call.1} parent=1 // pred_check_branch
      %39 = sbr.rel (0) target = $region17
    $region16: #{tpu_custom_call.1} parent=1 // pred_region
      %41 = dma.done [#allocation6], 16384
    $region17: #{tpu_custom_call.1} parent=1 // pred_fallthru
      _
    %v42 = vld [vmem:[#allocation2] sm:$0xf]
    %v43 = vld [vmem:[#allocation2 + $0x4] sm:$0xf]
    %v44 = vadd.f32 %v42, %v43
    %v45 = vmax.f32 %v42, %v43
    %v46 = vld [vmem:[#allocation2 + $0x8] sm:$0xf]
    %v47 = vadd.f32 %v44, %v46
    %v48 = vmax.f32 %v45, %v46
    %v49 = vld [vmem:[#allocation2 + $0xc] sm:$0xf]
    %v50 = vadd.f32 %v47, %v49
    %v51 = vmax.f32 %v48, %v49
    %v52 = vmul.f32 %v50, 0.25
    %v53 = vld [vmem:[#allocation5] sm:$0xff]
    %v54 = vld [vmem:[#allocation5 + $0x8] sm:$0xff]
    %v55 = vld [vmem:[#allocation5 + $0x10] sm:$0xff]
    %v56 = vld [vmem:[#allocation5 + $0x18] sm:$0xff]
    %v57 = vld [vmem:[#allocation5 + $0x20] sm:$0xff]
    %v58 = vld [vmem:[#allocation5 + $0x28] sm:$0xff]
    %v59 = vld [vmem:[#allocation5 + $0x30] sm:$0xff]
    %v60 = vld [vmem:[#allocation5 + $0x38] sm:$0xff]
    %v61 = vld [vmem:[#allocation5 + $0x40] sm:$0xff]
    %v62 = vld [vmem:[#allocation5 + $0x48] sm:$0xff]
    %v63 = vld [vmem:[#allocation5 + $0x50] sm:$0xff]
    %v64 = vld [vmem:[#allocation5 + $0x58] sm:$0xff]
    %v65 = vld [vmem:[#allocation5 + $0x60] sm:$0xff]
    %v66 = vld [vmem:[#allocation5 + $0x68] sm:$0xff]
    %v67 = vld [vmem:[#allocation5 + $0x70] sm:$0xff]
    %v68 = vld [vmem:[#allocation5 + $0x78] sm:$0xff]
    %v69 = vld [vmem:[#allocation5 + $0x80] sm:$0xff]
    %v70 = vld [vmem:[#allocation5 + $0x88] sm:$0xff]
    %v71 = vld [vmem:[#allocation5 + $0x90] sm:$0xff]
    %v72 = vld [vmem:[#allocation5 + $0x98] sm:$0xff]
    %v73 = vld [vmem:[#allocation5 + $0xa0] sm:$0xff]
    %v74 = vld [vmem:[#allocation5 + $0xa8] sm:$0xff]
    %v75 = vld [vmem:[#allocation5 + $0xb0] sm:$0xff]
    %v76 = vld [vmem:[#allocation5 + $0xb8] sm:$0xff]
    %v77 = vld [vmem:[#allocation5 + $0xc0] sm:$0xff]
    %v78 = vld [vmem:[#allocation5 + $0xc8] sm:$0xff]
    %v79 = vld [vmem:[#allocation5 + $0xd0] sm:$0xff]
    %v80 = vld [vmem:[#allocation5 + $0xd8] sm:$0xff]
    %v81 = vld [vmem:[#allocation5 + $0xe0] sm:$0xff]
    %v82 = vld [vmem:[#allocation5 + $0xe8] sm:$0xff]
    %v83 = vld [vmem:[#allocation5 + $0xf0] sm:$0xff]
    %v84 = vld [vmem:[#allocation5 + $0xf8] sm:$0xff]
    %v85 = vld [vmem:[#allocation5 + $0x100] sm:$0xff]
    %v86 = vld [vmem:[#allocation5 + $0x108] sm:$0xff]
    %v87 = vld [vmem:[#allocation5 + $0x110] sm:$0xff]
    %v88 = vld [vmem:[#allocation5 + $0x118] sm:$0xff]
    %v89 = vld [vmem:[#allocation5 + $0x120] sm:$0xff]
    %v90 = vld [vmem:[#allocation5 + $0x128] sm:$0xff]
    %v91 = vld [vmem:[#allocation5 + $0x130] sm:$0xff]
    %v92 = vld [vmem:[#allocation5 + $0x138] sm:$0xff]
    %v93 = vld [vmem:[#allocation5 + $0x140] sm:$0xff]
    %v94 = vld [vmem:[#allocation5 + $0x148] sm:$0xff]
    %v95 = vld [vmem:[#allocation5 + $0x150] sm:$0xff]
    %v96 = vld [vmem:[#allocation5 + $0x158] sm:$0xff]
    %v97 = vld [vmem:[#allocation5 + $0x160] sm:$0xff]
    %v98 = vld [vmem:[#allocation5 + $0x168] sm:$0xff]
    %v99 = vld [vmem:[#allocation5 + $0x170] sm:$0xff]
    %v100 = vld [vmem:[#allocation5 + $0x178] sm:$0xff]
    %v101 = vld [vmem:[#allocation5 + $0x180] sm:$0xff]
    %v102 = vld [vmem:[#allocation5 + $0x188] sm:$0xff]
    %v103 = vld [vmem:[#allocation5 + $0x190] sm:$0xff]
    %v104 = vld [vmem:[#allocation5 + $0x198] sm:$0xff]
    %v105 = vld [vmem:[#allocation5 + $0x1a0] sm:$0xff]
    %v106 = vld [vmem:[#allocation5 + $0x1a8] sm:$0xff]
    %v107 = vld [vmem:[#allocation5 + $0x1b0] sm:$0xff]
    %v108 = vld [vmem:[#allocation5 + $0x1b8] sm:$0xff]
    %v109 = vld [vmem:[#allocation5 + $0x1c0] sm:$0xff]
    %v110 = vld [vmem:[#allocation5 + $0x1c8] sm:$0xff]
    %v111 = vld [vmem:[#allocation5 + $0x1d0] sm:$0xff]
    %v112 = vld [vmem:[#allocation5 + $0x1d8] sm:$0xff]
    %v113 = vld [vmem:[#allocation5 + $0x1e0] sm:$0xff]
    %v114 = vld [vmem:[#allocation5 + $0x1e8] sm:$0xff]
    %v115 = vld [vmem:[#allocation5 + $0x1f0] sm:$0xff]
    %v116 = vld [vmem:[#allocation5 + $0x1f8] sm:$0xff]
    %v117 = vld [vmem:[#allocation5 + $0x200] sm:$0xff]
    %v118 = vld [vmem:[#allocation5 + $0x208] sm:$0xff]
    %v119 = vld [vmem:[#allocation5 + $0x210] sm:$0xff]
    %v120 = vld [vmem:[#allocation5 + $0x218] sm:$0xff]
    %v121 = vld [vmem:[#allocation5 + $0x220] sm:$0xff]
    %v122 = vld [vmem:[#allocation5 + $0x228] sm:$0xff]
    %v123 = vld [vmem:[#allocation5 + $0x230] sm:$0xff]
    %v124 = vld [vmem:[#allocation5 + $0x238] sm:$0xff]
    %v125 = vld [vmem:[#allocation5 + $0x240] sm:$0xff]
    %v126 = vld [vmem:[#allocation5 + $0x248] sm:$0xff]
    %v127 = vld [vmem:[#allocation5 + $0x250] sm:$0xff]
    %v128 = vld [vmem:[#allocation5 + $0x258] sm:$0xff]
    %v129 = vld [vmem:[#allocation5 + $0x260] sm:$0xff]
    %v130 = vld [vmem:[#allocation5 + $0x268] sm:$0xff]
    %v131 = vld [vmem:[#allocation5 + $0x270] sm:$0xff]
    %v132 = vld [vmem:[#allocation5 + $0x278] sm:$0xff]
    %v133 = vld [vmem:[#allocation5 + $0x280] sm:$0xff]
    %v134 = vld [vmem:[#allocation5 + $0x288] sm:$0xff]
    %v135 = vld [vmem:[#allocation5 + $0x290] sm:$0xff]
    %v136 = vld [vmem:[#allocation5 + $0x298] sm:$0xff]
    %v137 = vld [vmem:[#allocation5 + $0x2a0] sm:$0xff]
    %v138 = vld [vmem:[#allocation5 + $0x2a8] sm:$0xff]
    %v139 = vld [vmem:[#allocation5 + $0x2b0] sm:$0xff]
    %v140 = vld [vmem:[#allocation5 + $0x2b8] sm:$0xff]
    %v141 = vld [vmem:[#allocation5 + $0x2c0] sm:$0xff]
    %v142 = vld [vmem:[#allocation5 + $0x2c8] sm:$0xff]
    %v143 = vld [vmem:[#allocation5 + $0x2d0] sm:$0xff]
    %v144 = vld [vmem:[#allocation5 + $0x2d8] sm:$0xff]
    %v145 = vld [vmem:[#allocation5 + $0x2e0] sm:$0xff]
    %v146 = vld [vmem:[#allocation5 + $0x2e8] sm:$0xff]
    %v147 = vld [vmem:[#allocation5 + $0x2f0] sm:$0xff]
    %v148 = vld [vmem:[#allocation5 + $0x2f8] sm:$0xff]
    %v149 = vld [vmem:[#allocation5 + $0x300] sm:$0xff]
    %v150 = vld [vmem:[#allocation5 + $0x308] sm:$0xff]
    %v151 = vld [vmem:[#allocation5 + $0x310] sm:$0xff]
    %v152 = vld [vmem:[#allocation5 + $0x318] sm:$0xff]
    %v153 = vld [vmem:[#allocation5 + $0x320] sm:$0xff]
    %v154 = vld [vmem:[#allocation5 + $0x328] sm:$0xff]
    %v155 = vld [vmem:[#allocation5 + $0x330] sm:$0xff]
    %v156 = vld [vmem:[#allocation5 + $0x338] sm:$0xff]
    %v157 = vld [vmem:[#allocation5 + $0x340] sm:$0xff]
    %v158 = vld [vmem:[#allocation5 + $0x348] sm:$0xff]
    %v159 = vld [vmem:[#allocation5 + $0x350] sm:$0xff]
    %v160 = vld [vmem:[#allocation5 + $0x358] sm:$0xff]
    %v161 = vld [vmem:[#allocation5 + $0x360] sm:$0xff]
    %v162 = vld [vmem:[#allocation5 + $0x368] sm:$0xff]
    %v163 = vld [vmem:[#allocation5 + $0x370] sm:$0xff]
    %v164 = vld [vmem:[#allocation5 + $0x378] sm:$0xff]
    %v165 = vld [vmem:[#allocation5 + $0x380] sm:$0xff]
    %v166 = vld [vmem:[#allocation5 + $0x388] sm:$0xff]
    %v167 = vld [vmem:[#allocation5 + $0x390] sm:$0xff]
    %v168 = vld [vmem:[#allocation5 + $0x398] sm:$0xff]
    %v169 = vld [vmem:[#allocation5 + $0x3a0] sm:$0xff]
    %v170 = vld [vmem:[#allocation5 + $0x3a8] sm:$0xff]
    %v171 = vld [vmem:[#allocation5 + $0x3b0] sm:$0xff]
    %v172 = vld [vmem:[#allocation5 + $0x3b8] sm:$0xff]
    %v173 = vld [vmem:[#allocation5 + $0x3c0] sm:$0xff]
    %v174 = vld [vmem:[#allocation5 + $0x3c8] sm:$0xff]
    %v175 = vld [vmem:[#allocation5 + $0x3d0] sm:$0xff]
    %v176 = vld [vmem:[#allocation5 + $0x3d8] sm:$0xff]
    %v177 = vld [vmem:[#allocation5 + $0x3e0] sm:$0xff]
    %v178 = vld [vmem:[#allocation5 + $0x3e8] sm:$0xff]
    %v179 = vld [vmem:[#allocation5 + $0x3f0] sm:$0xff]
    %v180 = vld [vmem:[#allocation5 + $0x3f8] sm:$0xff]
    %182 = vst [vmem:[#allocation1] ss:$4 sm:$0xff] %v51
    %v183 = vld.sshfl [vmem:[#allocation1] sm:$0xff pattern:$0x73625140]
    %v184 = vld.sshfl [vmem:[#allocation1 + $0x8] sm:$0xff pattern:$0x73625140]
    %v187 = vand.u32 %v147, 4294901760
    %188 = vmatpush.msra.mxu0 %v187
    %v189 = vand.u32 %v145, 4294901760
    %190 = vmatpush.msra.mxu0 %v189
    %v191 = vand.u32 %v143, 4294901760
    %192 = vmatpush.msra.mxu0 %v191
    %v193 = vand.u32 %v141, 4294901760
    %194 = vmatpush.msra.mxu0 %v193
    %v195 = vand.u32 %v139, 4294901760
    %196 = vmatpush.msra.mxu0 %v195
    %v197 = vand.u32 %v137, 4294901760
    %198 = vmatpush.msra.mxu0 %v197
    %v199 = vand.u32 %v135, 4294901760
    %200 = vmatpush.msra.mxu0 %v199
    %v201 = vand.u32 %v133, 4294901760
    %202 = vmatpush.msra.mxu0 %v201
    %v203 = vand.u32 %v131, 4294901760
    %204 = vmatpush.msra.mxu0 %v203
    %v205 = vand.u32 %v129, 4294901760
    %206 = vmatpush.msra.mxu0 %v205
    %v207 = vand.u32 %v127, 4294901760
    %208 = vmatpush.msra.mxu0 %v207
    %v209 = vand.u32 %v125, 4294901760
    %210 = vmatpush.msra.mxu0 %v209
    %v211 = vand.u32 %v123, 4294901760
    %212 = vmatpush.msra.mxu0 %v211
    %v213 = vand.u32 %v121, 4294901760
    %214 = vmatpush.msra.mxu0 %v213
    %v215 = vand.u32 %v119, 4294901760
    %216 = vmatpush.msra.mxu0 %v215
    %v217 = vand.u32 %v117, 4294901760
    %218 = vmatpush.msra.mxu0 %v217
    %v219 = vand.u32 %v183, 4294901760
    %v220 = vsub.f32 %v183, %v219
    %v221 = vand.u32 %v220, 4294901760
    %v222 = vsub.f32 %v220, %v221
    %v223 = vand.u32 %v222, 4294901760
    %224 = vmatmul.f32.gmra.mxu0 %v223
    %v225 = vpop.f32.mrf.mxu0
    %v226 = vadd.f32 0.0, %v225
    %227 = vdwg.mxu0
    %v228 = vand.u32 %v147, 4294901760
    %v229 = vsub.f32 %v147, %v228
    %v230 = vand.u32 %v229, 4294901760
    %v231 = vsub.f32 %v229, %v230
    %v232 = vand.u32 %v231, 4294901760
    %233 = vmatpush.msra.mxu0 %v232
    %v234 = vand.u32 %v145, 4294901760
    %v235 = vsub.f32 %v145, %v234
    %v236 = vand.u32 %v235, 4294901760
    %v237 = vsub.f32 %v235, %v236
    %v238 = vand.u32 %v237, 4294901760
    %239 = vmatpush.msra.mxu0 %v238
    %v240 = vand.u32 %v143, 4294901760
    %v241 = vsub.f32 %v143, %v240
    %v242 = vand.u32 %v241, 4294901760
    %v243 = vsub.f32 %v241, %v242
    %v244 = vand.u32 %v243, 4294901760
    %245 = vmatpush.msra.mxu0 %v244
    %v246 = vand.u32 %v141, 4294901760
    %v247 = vsub.f32 %v141, %v246
    %v248 = vand.u32 %v247, 4294901760
    %v249 = vsub.f32 %v247, %v248
    %v250 = vand.u32 %v249, 4294901760
    %251 = vmatpush.msra.mxu0 %v250
    %v252 = vand.u32 %v139, 4294901760
    %v253 = vsub.f32 %v139, %v252
    %v254 = vand.u32 %v253, 4294901760
    %v255 = vsub.f32 %v253, %v254
    %v256 = vand.u32 %v255, 4294901760
    %257 = vmatpush.msra.mxu0 %v256
    %v258 = vand.u32 %v137, 4294901760
    %v259 = vsub.f32 %v137, %v258
    %v260 = vand.u32 %v259, 4294901760
    %v261 = vsub.f32 %v259, %v260
    %v262 = vand.u32 %v261, 4294901760
    %263 = vmatpush.msra.mxu0 %v262
    %v264 = vand.u32 %v135, 4294901760
    %v265 = vsub.f32 %v135, %v264
    %v266 = vand.u32 %v265, 4294901760
    %v267 = vsub.f32 %v265, %v266
    %v268 = vand.u32 %v267, 4294901760
    %269 = vmatpush.msra.mxu0 %v268
    %v270 = vand.u32 %v133, 4294901760
    %v271 = vsub.f32 %v133, %v270
    %v272 = vand.u32 %v271, 4294901760
    %v273 = vsub.f32 %v271, %v272
    %v274 = vand.u32 %v273, 4294901760
    %275 = vmatpush.msra.mxu0 %v274
    %v276 = vand.u32 %v131, 4294901760
    %v277 = vsub.f32 %v131, %v276
    %v278 = vand.u32 %v277, 4294901760
    %v279 = vsub.f32 %v277, %v278
    %v280 = vand.u32 %v279, 4294901760
    %281 = vmatpush.msra.mxu0 %v280
    %v282 = vand.u32 %v129, 4294901760
    %v283 = vsub.f32 %v129, %v282
    %v284 = vand.u32 %v283, 4294901760
    %v285 = vsub.f32 %v283, %v284
    %v286 = vand.u32 %v285, 4294901760
    %287 = vmatpush.msra.mxu0 %v286
    %v288 = vand.u32 %v127, 4294901760
    %v289 = vsub.f32 %v127, %v288
    %v290 = vand.u32 %v289, 4294901760
    %v291 = vsub.f32 %v289, %v290
    %v292 = vand.u32 %v291, 4294901760
    %293 = vmatpush.msra.mxu0 %v292
    %v294 = vand.u32 %v125, 4294901760
    %v295 = vsub.f32 %v125, %v294
    %v296 = vand.u32 %v295, 4294901760
    %v297 = vsub.f32 %v295, %v296
    %v298 = vand.u32 %v297, 4294901760
    %299 = vmatpush.msra.mxu0 %v298
    %v300 = vand.u32 %v123, 4294901760
    %v301 = vsub.f32 %v123, %v300
    %v302 = vand.u32 %v301, 4294901760
    %v303 = vsub.f32 %v301, %v302
    %v304 = vand.u32 %v303, 4294901760
    %305 = vmatpush.msra.mxu0 %v304
    %v306 = vand.u32 %v121, 4294901760
    %v307 = vsub.f32 %v121, %v306
    %v308 = vand.u32 %v307, 4294901760
    %v309 = vsub.f32 %v307, %v308
    %v310 = vand.u32 %v309, 4294901760
    %311 = vmatpush.msra.mxu0 %v310
    %v312 = vand.u32 %v119, 4294901760
    %v313 = vsub.f32 %v119, %v312
    %v314 = vand.u32 %v313, 4294901760
    %v315 = vsub.f32 %v313, %v314
    %v316 = vand.u32 %v315, 4294901760
    %317 = vmatpush.msra.mxu0 %v316
    %v318 = vand.u32 %v117, 4294901760
    %v319 = vsub.f32 %v117, %v318
    %v320 = vand.u32 %v319, 4294901760
    %v321 = vsub.f32 %v319, %v320
    %v322 = vand.u32 %v321, 4294901760
    %323 = vmatpush.msra.mxu0 %v322
    %v324 = vand.u32 %v183, 4294901760
    %325 = vmatmul.f32.gmra.mxu0 %v324
    %v326 = vpop.f32.mrf.mxu0
    %v327 = vadd.f32 %v226, %v326
    %328 = vdwg.mxu0
    %v329 = vand.u32 %v147, 4294901760
    %v330 = vsub.f32 %v147, %v329
    %331 = vmatpush.msra.mxu0 %v330
    %v332 = vand.u32 %v145, 4294901760
    %v333 = vsub.f32 %v145, %v332
    %334 = vmatpush.msra.mxu0 %v333
    %v335 = vand.u32 %v143, 4294901760
    %v336 = vsub.f32 %v143, %v335
    %337 = vmatpush.msra.mxu0 %v336
    %v338 = vand.u32 %v141, 4294901760
    %v339 = vsub.f32 %v141, %v338
    %340 = vmatpush.msra.mxu0 %v339
    %v341 = vand.u32 %v139, 4294901760
    %v342 = vsub.f32 %v139, %v341
    %343 = vmatpush.msra.mxu0 %v342
    %v344 = vand.u32 %v137, 4294901760
    %v345 = vsub.f32 %v137, %v344
    %346 = vmatpush.msra.mxu0 %v345
    %v347 = vand.u32 %v135, 4294901760
    %v348 = vsub.f32 %v135, %v347
    %349 = vmatpush.msra.mxu0 %v348
    %v350 = vand.u32 %v133, 4294901760
    %v351 = vsub.f32 %v133, %v350
    %352 = vmatpush.msra.mxu0 %v351
    %v353 = vand.u32 %v131, 4294901760
    %v354 = vsub.f32 %v131, %v353
    %355 = vmatpush.msra.mxu0 %v354
    %v356 = vand.u32 %v129, 4294901760
    %v357 = vsub.f32 %v129, %v356
    %358 = vmatpush.msra.mxu0 %v357
    %v359 = vand.u32 %v127, 4294901760
    %v360 = vsub.f32 %v127, %v359
    %361 = vmatpush.msra.mxu0 %v360
    %v362 = vand.u32 %v125, 4294901760
    %v363 = vsub.f32 %v125, %v362
    %364 = vmatpush.msra.mxu0 %v363
    %v365 = vand.u32 %v123, 4294901760
    %v366 = vsub.f32 %v123, %v365
    %367 = vmatpush.msra.mxu0 %v366
    %v368 = vand.u32 %v121, 4294901760
    %v369 = vsub.f32 %v121, %v368
    %370 = vmatpush.msra.mxu0 %v369
    %v371 = vand.u32 %v119, 4294901760
    %v372 = vsub.f32 %v119, %v371
    %373 = vmatpush.msra.mxu0 %v372
    %v374 = vand.u32 %v117, 4294901760
    %v375 = vsub.f32 %v117, %v374
    %376 = vmatpush.msra.mxu0 %v375
    %v377 = vand.u32 %v183, 4294901760
    %v378 = vsub.f32 %v183, %v377
    %379 = vmatmul.f32.gmra.mxu0 %v378
    %v380 = vpop.f32.mrf.mxu0
    %v381 = vadd.f32 %v327, %v380
    %382 = vdwg.mxu0
    %v383 = vand.u32 %v147, 4294901760
    %384 = vmatpush.msra.mxu0 %v383
    %v385 = vand.u32 %v145, 4294901760
    %386 = vmatpush.msra.mxu0 %v385
    %v387 = vand.u32 %v143, 4294901760
    %388 = vmatpush.msra.mxu0 %v387
    %v389 = vand.u32 %v141, 4294901760
    %390 = vmatpush.msra.mxu0 %v389
    %v391 = vand.u32 %v139, 4294901760
    %392 = vmatpush.msra.mxu0 %v391
    %v393 = vand.u32 %v137, 4294901760
    %394 = vmatpush.msra.mxu0 %v393
    %v395 = vand.u32 %v135, 4294901760
    %396 = vmatpush.msra.mxu0 %v395
    %v397 = vand.u32 %v133, 4294901760
    %398 = vmatpush.msra.mxu0 %v397
    %v399 = vand.u32 %v131, 4294901760
    %400 = vmatpush.msra.mxu0 %v399
    %v401 = vand.u32 %v129, 4294901760
    %402 = vmatpush.msra.mxu0 %v401
    %v403 = vand.u32 %v127, 4294901760
    %404 = vmatpush.msra.mxu0 %v403
    %v405 = vand.u32 %v125, 4294901760
    %406 = vmatpush.msra.mxu0 %v405
    %v407 = vand.u32 %v123, 4294901760
    %408 = vmatpush.msra.mxu0 %v407
    %v409 = vand.u32 %v121, 4294901760
    %410 = vmatpush.msra.mxu0 %v409
    %v411 = vand.u32 %v119, 4294901760
    %412 = vmatpush.msra.mxu0 %v411
    %v413 = vand.u32 %v117, 4294901760
    %414 = vmatpush.msra.mxu0 %v413
    %v415 = vand.u32 %v183, 4294901760
    %v416 = vsub.f32 %v183, %v415
    %v417 = vand.u32 %v416, 4294901760
    %418 = vmatmul.f32.gmra.mxu0 %v417
    %v419 = vpop.f32.mrf.mxu0
    %v420 = vadd.f32 %v381, %v419
    %421 = vdwg.mxu0
    %v422 = vand.u32 %v147, 4294901760
    %v423 = vsub.f32 %v147, %v422
    %v424 = vand.u32 %v423, 4294901760
    %425 = vmatpush.msra.mxu0 %v424
    %v426 = vand.u32 %v145, 4294901760
    %v427 = vsub.f32 %v145, %v426
    %v428 = vand.u32 %v427, 4294901760
    %429 = vmatpush.msra.mxu0 %v428
    %v430 = vand.u32 %v143, 4294901760
    %v431 = vsub.f32 %v143, %v430
    %v432 = vand.u32 %v431, 4294901760
    %433 = vmatpush.msra.mxu0 %v432
    %v434 = vand.u32 %v141, 4294901760
    %v435 = vsub.f32 %v141, %v434
    %v436 = vand.u32 %v435, 4294901760
    %437 = vmatpush.msra.mxu0 %v436
    %v438 = vand.u32 %v139, 4294901760
    %v439 = vsub.f32 %v139, %v438
    %v440 = vand.u32 %v439, 4294901760
    %441 = vmatpush.msra.mxu0 %v440
    %v442 = vand.u32 %v137, 4294901760
    %v443 = vsub.f32 %v137, %v442
    %v444 = vand.u32 %v443, 4294901760
    %445 = vmatpush.msra.mxu0 %v444
    %v446 = vand.u32 %v135, 4294901760
    %v447 = vsub.f32 %v135, %v446
    %v448 = vand.u32 %v447, 4294901760
    %449 = vmatpush.msra.mxu0 %v448
    %v450 = vand.u32 %v133, 4294901760
    %v451 = vsub.f32 %v133, %v450
    %v452 = vand.u32 %v451, 4294901760
    %453 = vmatpush.msra.mxu0 %v452
    %v454 = vand.u32 %v131, 4294901760
    %v455 = vsub.f32 %v131, %v454
    %v456 = vand.u32 %v455, 4294901760
    %457 = vmatpush.msra.mxu0 %v456
    %v458 = vand.u32 %v129, 4294901760
    %v459 = vsub.f32 %v129, %v458
    %v460 = vand.u32 %v459, 4294901760
    %461 = vmatpush.msra.mxu0 %v460
    %v462 = vand.u32 %v127, 4294901760
    %v463 = vsub.f32 %v127, %v462
    %v464 = vand.u32 %v463, 4294901760
    %465 = vmatpush.msra.mxu0 %v464
    %v466 = vand.u32 %v125, 4294901760
    %v467 = vsub.f32 %v125, %v466
    %v468 = vand.u32 %v467, 4294901760
    %469 = vmatpush.msra.mxu0 %v468
    %v470 = vand.u32 %v123, 4294901760
    %v471 = vsub.f32 %v123, %v470
    %v472 = vand.u32 %v471, 4294901760
    %473 = vmatpush.msra.mxu0 %v472
    %v474 = vand.u32 %v121, 4294901760
    %v475 = vsub.f32 %v121, %v474
    %v476 = vand.u32 %v475, 4294901760
    %477 = vmatpush.msra.mxu0 %v476
    %v478 = vand.u32 %v119, 4294901760
    %v479 = vsub.f32 %v119, %v478
    %v480 = vand.u32 %v479, 4294901760
    %481 = vmatpush.msra.mxu0 %v480
    %v482 = vand.u32 %v117, 4294901760
    %v483 = vsub.f32 %v117, %v482
    %v484 = vand.u32 %v483, 4294901760
    %485 = vmatpush.msra.mxu0 %v484
    %v486 = vand.u32 %v183, 4294901760
    %487 = vmatmul.f32.gmra.mxu0 %v486
    %v488 = vpop.f32.mrf.mxu0
    %v489 = vadd.f32 %v420, %v488
    %490 = vdwg.mxu0
    %v491 = vand.u32 %v147, 4294901760
    %492 = vmatpush.msra.mxu0 %v491
    %v493 = vand.u32 %v145, 4294901760
    %494 = vmatpush.msra.mxu0 %v493
    %v495 = vand.u32 %v143, 4294901760
    %496 = vmatpush.msra.mxu0 %v495
    %v497 = vand.u32 %v141, 4294901760
    %498 = vmatpush.msra.mxu0 %v497
    %v499 = vand.u32 %v139, 4294901760
    %500 = vmatpush.msra.mxu0 %v499
    %v501 = vand.u32 %v137, 4294901760
    %502 = vmatpush.msra.mxu0 %v501
    %v503 = vand.u32 %v135, 4294901760
    %504 = vmatpush.msra.mxu0 %v503
    %v505 = vand.u32 %v133, 4294901760
    %506 = vmatpush.msra.mxu0 %v505
    %v507 = vand.u32 %v131, 4294901760
    %508 = vmatpush.msra.mxu0 %v507
    %v509 = vand.u32 %v129, 4294901760
    %510 = vmatpush.msra.mxu0 %v509
    %v511 = vand.u32 %v127, 4294901760
    %512 = vmatpush.msra.mxu0 %v511
    %v513 = vand.u32 %v125, 4294901760
    %514 = vmatpush.msra.mxu0 %v513
    %v515 = vand.u32 %v123, 4294901760
    %516 = vmatpush.msra.mxu0 %v515
    %v517 = vand.u32 %v121, 4294901760
    %518 = vmatpush.msra.mxu0 %v517
    %v519 = vand.u32 %v119, 4294901760
    %520 = vmatpush.msra.mxu0 %v519
    %v521 = vand.u32 %v117, 4294901760
    %522 = vmatpush.msra.mxu0 %v521
    %v523 = vand.u32 %v183, 4294901760
    %524 = vmatmul.f32.gmra.mxu0 %v523
    %v525 = vpop.f32.mrf.mxu0
    %v526 = vadd.f32 %v489, %v525
    %527 = vdwg.mxu0
    %v528 = vand.u32 %v179, 4294901760
    %529 = vmatpush.msra.mxu0 %v528
    %v530 = vand.u32 %v177, 4294901760
    %531 = vmatpush.msra.mxu0 %v530
    %v532 = vand.u32 %v175, 4294901760
    %533 = vmatpush.msra.mxu0 %v532
    %v534 = vand.u32 %v173, 4294901760
    %535 = vmatpush.msra.mxu0 %v534
    %v536 = vand.u32 %v171, 4294901760
    %537 = vmatpush.msra.mxu0 %v536
    %v538 = vand.u32 %v169, 4294901760
    %539 = vmatpush.msra.mxu0 %v538
    %v540 = vand.u32 %v167, 4294901760
    %541 = vmatpush.msra.mxu0 %v540
    %v542 = vand.u32 %v165, 4294901760
    %543 = vmatpush.msra.mxu0 %v542
    %v544 = vand.u32 %v163, 4294901760
    %545 = vmatpush.msra.mxu0 %v544
    %v546 = vand.u32 %v161, 4294901760
    %547 = vmatpush.msra.mxu0 %v546
    %v548 = vand.u32 %v159, 4294901760
    %549 = vmatpush.msra.mxu0 %v548
    %v550 = vand.u32 %v157, 4294901760
    %551 = vmatpush.msra.mxu0 %v550
    %v552 = vand.u32 %v155, 4294901760
    %553 = vmatpush.msra.mxu0 %v552
    %v554 = vand.u32 %v153, 4294901760
    %555 = vmatpush.msra.mxu0 %v554
    %v556 = vand.u32 %v151, 4294901760
    %557 = vmatpush.msra.mxu0 %v556
    %v558 = vand.u32 %v149, 4294901760
    %559 = vmatpush.msra.mxu0 %v558
    %v560 = vand.u32 %v184, 4294901760
    %v561 = vsub.f32 %v184, %v560
    %v562 = vand.u32 %v561, 4294901760
    %v563 = vsub.f32 %v561, %v562
    %v564 = vand.u32 %v563, 4294901760
    %565 = vmatmul.f32.gmra.mxu0 %v564
    %v566 = vpop.f32.mrf.mxu0
    %v567 = vadd.f32 %v526, %v566
    %568 = vdwg.mxu0
    %v569 = vand.u32 %v179, 4294901760
    %v570 = vsub.f32 %v179, %v569
    %v571 = vand.u32 %v570, 4294901760
    %v572 = vsub.f32 %v570, %v571
    %v573 = vand.u32 %v572, 4294901760
    %574 = vmatpush.msra.mxu0 %v573
    %v575 = vand.u32 %v177, 4294901760
    %v576 = vsub.f32 %v177, %v575
    %v577 = vand.u32 %v576, 4294901760
    %v578 = vsub.f32 %v576, %v577
    %v579 = vand.u32 %v578, 4294901760
    %580 = vmatpush.msra.mxu0 %v579
    %v581 = vand.u32 %v175, 4294901760
    %v582 = vsub.f32 %v175, %v581
    %v583 = vand.u32 %v582, 4294901760
    %v584 = vsub.f32 %v582, %v583
    %v585 = vand.u32 %v584, 4294901760
    %586 = vmatpush.msra.mxu0 %v585
    %v587 = vand.u32 %v173, 4294901760
    %v588 = vsub.f32 %v173, %v587
    %v589 = vand.u32 %v588, 4294901760
    %v590 = vsub.f32 %v588, %v589
    %v591 = vand.u32 %v590, 4294901760
    %592 = vmatpush.msra.mxu0 %v591
    %v593 = vand.u32 %v171, 4294901760
    %v594 = vsub.f32 %v171, %v593
    %v595 = vand.u32 %v594, 4294901760
    %v596 = vsub.f32 %v594, %v595
    %v597 = vand.u32 %v596, 4294901760
    %598 = vmatpush.msra.mxu0 %v597
    %v599 = vand.u32 %v169, 4294901760
    %v600 = vsub.f32 %v169, %v599
    %v601 = vand.u32 %v600, 4294901760
    %v602 = vsub.f32 %v600, %v601
    %v603 = vand.u32 %v602, 4294901760
    %604 = vmatpush.msra.mxu0 %v603
    %v605 = vand.u32 %v167, 4294901760
    %v606 = vsub.f32 %v167, %v605
    %v607 = vand.u32 %v606, 4294901760
    %v608 = vsub.f32 %v606, %v607
    %v609 = vand.u32 %v608, 4294901760
    %610 = vmatpush.msra.mxu0 %v609
    %v611 = vand.u32 %v165, 4294901760
    %v612 = vsub.f32 %v165, %v611
    %v613 = vand.u32 %v612, 4294901760
    %v614 = vsub.f32 %v612, %v613
    %v615 = vand.u32 %v614, 4294901760
    %616 = vmatpush.msra.mxu0 %v615
    %v617 = vand.u32 %v163, 4294901760
    %v618 = vsub.f32 %v163, %v617
    %v619 = vand.u32 %v618, 4294901760
    %v620 = vsub.f32 %v618, %v619
    %v621 = vand.u32 %v620, 4294901760
    %622 = vmatpush.msra.mxu0 %v621
    %v623 = vand.u32 %v161, 4294901760
    %v624 = vsub.f32 %v161, %v623
    %v625 = vand.u32 %v624, 4294901760
    %v626 = vsub.f32 %v624, %v625
    %v627 = vand.u32 %v626, 4294901760
    %628 = vmatpush.msra.mxu0 %v627
    %v629 = vand.u32 %v159, 4294901760
    %v630 = vsub.f32 %v159, %v629
    %v631 = vand.u32 %v630, 4294901760
    %v632 = vsub.f32 %v630, %v631
    %v633 = vand.u32 %v632, 4294901760
    %634 = vmatpush.msra.mxu0 %v633
    %v635 = vand.u32 %v157, 4294901760
    %v636 = vsub.f32 %v157, %v635
    %v637 = vand.u32 %v636, 4294901760
    %v638 = vsub.f32 %v636, %v637
    %v639 = vand.u32 %v638, 4294901760
    %640 = vmatpush.msra.mxu0 %v639
    %v641 = vand.u32 %v155, 4294901760
    %v642 = vsub.f32 %v155, %v641
    %v643 = vand.u32 %v642, 4294901760
    %v644 = vsub.f32 %v642, %v643
    %v645 = vand.u32 %v644, 4294901760
    %646 = vmatpush.msra.mxu0 %v645
    %v647 = vand.u32 %v153, 4294901760
    %v648 = vsub.f32 %v153, %v647
    %v649 = vand.u32 %v648, 4294901760
    %v650 = vsub.f32 %v648, %v649
    %v651 = vand.u32 %v650, 4294901760
    %652 = vmatpush.msra.mxu0 %v651
    %v653 = vand.u32 %v151, 4294901760
    %v654 = vsub.f32 %v151, %v653
    %v655 = vand.u32 %v654, 4294901760
    %v656 = vsub.f32 %v654, %v655
    %v657 = vand.u32 %v656, 4294901760
    %658 = vmatpush.msra.mxu0 %v657
    %v659 = vand.u32 %v149, 4294901760
    %v660 = vsub.f32 %v149, %v659
    %v661 = vand.u32 %v660, 4294901760
    %v662 = vsub.f32 %v660, %v661
    %v663 = vand.u32 %v662, 4294901760
    %664 = vmatpush.msra.mxu0 %v663
    %v665 = vand.u32 %v184, 4294901760
    %666 = vmatmul.f32.gmra.mxu0 %v665
    %v667 = vpop.f32.mrf.mxu0
    %v668 = vadd.f32 %v567, %v667
    %669 = vdwg.mxu0
    %v670 = vand.u32 %v179, 4294901760
    %v671 = vsub.f32 %v179, %v670
    %672 = vmatpush.msra.mxu0 %v671
    %v673 = vand.u32 %v177, 4294901760
    %v674 = vsub.f32 %v177, %v673
    %675 = vmatpush.msra.mxu0 %v674
    %v676 = vand.u32 %v175, 4294901760
    %v677 = vsub.f32 %v175, %v676
    %678 = vmatpush.msra.mxu0 %v677
    %v679 = vand.u32 %v173, 4294901760
    %v680 = vsub.f32 %v173, %v679
    %681 = vmatpush.msra.mxu0 %v680
    %v682 = vand.u32 %v171, 4294901760
    %v683 = vsub.f32 %v171, %v682
    %684 = vmatpush.msra.mxu0 %v683
    %v685 = vand.u32 %v169, 4294901760
    %v686 = vsub.f32 %v169, %v685
    %687 = vmatpush.msra.mxu0 %v686
    %v688 = vand.u32 %v167, 4294901760
    %v689 = vsub.f32 %v167, %v688
    %690 = vmatpush.msra.mxu0 %v689
    %v691 = vand.u32 %v165, 4294901760
    %v692 = vsub.f32 %v165, %v691
    %693 = vmatpush.msra.mxu0 %v692
    %v694 = vand.u32 %v163, 4294901760
    %v695 = vsub.f32 %v163, %v694
    %696 = vmatpush.msra.mxu0 %v695
    %v697 = vand.u32 %v161, 4294901760
    %v698 = vsub.f32 %v161, %v697
    %699 = vmatpush.msra.mxu0 %v698
    %v700 = vand.u32 %v159, 4294901760
    %v701 = vsub.f32 %v159, %v700
    %702 = vmatpush.msra.mxu0 %v701
    %v703 = vand.u32 %v157, 4294901760
    %v704 = vsub.f32 %v157, %v703
    %705 = vmatpush.msra.mxu0 %v704
    %v706 = vand.u32 %v155, 4294901760
    %v707 = vsub.f32 %v155, %v706
    %708 = vmatpush.msra.mxu0 %v707
    %v709 = vand.u32 %v153, 4294901760
    %v710 = vsub.f32 %v153, %v709
    %711 = vmatpush.msra.mxu0 %v710
    %v712 = vand.u32 %v151, 4294901760
    %v713 = vsub.f32 %v151, %v712
    %714 = vmatpush.msra.mxu0 %v713
    %v715 = vand.u32 %v149, 4294901760
    %v716 = vsub.f32 %v149, %v715
    %717 = vmatpush.msra.mxu0 %v716
    %v718 = vand.u32 %v184, 4294901760
    %v719 = vsub.f32 %v184, %v718
    %720 = vmatmul.f32.gmra.mxu0 %v719
    %v721 = vpop.f32.mrf.mxu0
    %v722 = vadd.f32 %v668, %v721
    %723 = vdwg.mxu0
    %v724 = vand.u32 %v179, 4294901760
    %725 = vmatpush.msra.mxu0 %v724
    %v726 = vand.u32 %v177, 4294901760
    %727 = vmatpush.msra.mxu0 %v726
    %v728 = vand.u32 %v175, 4294901760
    %729 = vmatpush.msra.mxu0 %v728
    %v730 = vand.u32 %v173, 4294901760
    %731 = vmatpush.msra.mxu0 %v730
    %v732 = vand.u32 %v171, 4294901760
    %733 = vmatpush.msra.mxu0 %v732
    %v734 = vand.u32 %v169, 4294901760
    %735 = vmatpush.msra.mxu0 %v734
    %v736 = vand.u32 %v167, 4294901760
    %737 = vmatpush.msra.mxu0 %v736
    %v738 = vand.u32 %v165, 4294901760
    %739 = vmatpush.msra.mxu0 %v738
    %v740 = vand.u32 %v163, 4294901760
    %741 = vmatpush.msra.mxu0 %v740
    %v742 = vand.u32 %v161, 4294901760
    %743 = vmatpush.msra.mxu0 %v742
    %v744 = vand.u32 %v159, 4294901760
    %745 = vmatpush.msra.mxu0 %v744
    %v746 = vand.u32 %v157, 4294901760
    %747 = vmatpush.msra.mxu0 %v746
    %v748 = vand.u32 %v155, 4294901760
    %749 = vmatpush.msra.mxu0 %v748
    %v750 = vand.u32 %v153, 4294901760
    %751 = vmatpush.msra.mxu0 %v750
    %v752 = vand.u32 %v151, 4294901760
    %753 = vmatpush.msra.mxu0 %v752
    %v754 = vand.u32 %v149, 4294901760
    %755 = vmatpush.msra.mxu0 %v754
    %v756 = vand.u32 %v184, 4294901760
    %v757 = vsub.f32 %v184, %v756
    %v758 = vand.u32 %v757, 4294901760
    %759 = vmatmul.f32.gmra.mxu0 %v758
    %v760 = vpop.f32.mrf.mxu0
    %v761 = vadd.f32 %v722, %v760
    %762 = vdwg.mxu0
    %v763 = vand.u32 %v179, 4294901760
    %v764 = vsub.f32 %v179, %v763
    %v765 = vand.u32 %v764, 4294901760
    %766 = vmatpush.msra.mxu0 %v765
    %v767 = vand.u32 %v177, 4294901760
    %v768 = vsub.f32 %v177, %v767
    %v769 = vand.u32 %v768, 4294901760
    %770 = vmatpush.msra.mxu0 %v769
    %v771 = vand.u32 %v175, 4294901760
    %v772 = vsub.f32 %v175, %v771
    %v773 = vand.u32 %v772, 4294901760
    %774 = vmatpush.msra.mxu0 %v773
    %v775 = vand.u32 %v173, 4294901760
    %v776 = vsub.f32 %v173, %v775
    %v777 = vand.u32 %v776, 4294901760
    %778 = vmatpush.msra.mxu0 %v777
    %v779 = vand.u32 %v171, 4294901760
    %v780 = vsub.f32 %v171, %v779
    %v781 = vand.u32 %v780, 4294901760
    %782 = vmatpush.msra.mxu0 %v781
    %v783 = vand.u32 %v169, 4294901760
    %v784 = vsub.f32 %v169, %v783
    %v785 = vand.u32 %v784, 4294901760
    %786 = vmatpush.msra.mxu0 %v785
    %v787 = vand.u32 %v167, 4294901760
    %v788 = vsub.f32 %v167, %v787
    %v789 = vand.u32 %v788, 4294901760
    %790 = vmatpush.msra.mxu0 %v789
    %v791 = vand.u32 %v165, 4294901760
    %v792 = vsub.f32 %v165, %v791
    %v793 = vand.u32 %v792, 4294901760
    %794 = vmatpush.msra.mxu0 %v793
    %v795 = vand.u32 %v163, 4294901760
    %v796 = vsub.f32 %v163, %v795
    %v797 = vand.u32 %v796, 4294901760
    %798 = vmatpush.msra.mxu0 %v797
    %v799 = vand.u32 %v161, 4294901760
    %v800 = vsub.f32 %v161, %v799
    %v801 = vand.u32 %v800, 4294901760
    %802 = vmatpush.msra.mxu0 %v801
    %v803 = vand.u32 %v159, 4294901760
    %v804 = vsub.f32 %v159, %v803
    %v805 = vand.u32 %v804, 4294901760
    %806 = vmatpush.msra.mxu0 %v805
    %v807 = vand.u32 %v157, 4294901760
    %v808 = vsub.f32 %v157, %v807
    %v809 = vand.u32 %v808, 4294901760
    %810 = vmatpush.msra.mxu0 %v809
    %v811 = vand.u32 %v155, 4294901760
    %v812 = vsub.f32 %v155, %v811
    %v813 = vand.u32 %v812, 4294901760
    %814 = vmatpush.msra.mxu0 %v813
    %v815 = vand.u32 %v153, 4294901760
    %v816 = vsub.f32 %v153, %v815
    %v817 = vand.u32 %v816, 4294901760
    %818 = vmatpush.msra.mxu0 %v817
    %v819 = vand.u32 %v151, 4294901760
    %v820 = vsub.f32 %v151, %v819
    %v821 = vand.u32 %v820, 4294901760
    %822 = vmatpush.msra.mxu0 %v821
    %v823 = vand.u32 %v149, 4294901760
    %v824 = vsub.f32 %v149, %v823
    %v825 = vand.u32 %v824, 4294901760
    %826 = vmatpush.msra.mxu0 %v825
    %v827 = vand.u32 %v184, 4294901760
    %828 = vmatmul.f32.gmra.mxu0 %v827
    %v829 = vpop.f32.mrf.mxu0
    %v830 = vadd.f32 %v761, %v829
    %831 = vdwg.mxu0
    %v832 = vand.u32 %v179, 4294901760
    %833 = vmatpush.msra.mxu0 %v832
    %v834 = vand.u32 %v177, 4294901760
    %835 = vmatpush.msra.mxu0 %v834
    %v836 = vand.u32 %v175, 4294901760
    %837 = vmatpush.msra.mxu0 %v836
    %v838 = vand.u32 %v173, 4294901760
    %839 = vmatpush.msra.mxu0 %v838
    %v840 = vand.u32 %v171, 4294901760
    %841 = vmatpush.msra.mxu0 %v840
    %v842 = vand.u32 %v169, 4294901760
    %843 = vmatpush.msra.mxu0 %v842
    %v844 = vand.u32 %v167, 4294901760
    %845 = vmatpush.msra.mxu0 %v844
    %v846 = vand.u32 %v165, 4294901760
    %847 = vmatpush.msra.mxu0 %v846
    %v848 = vand.u32 %v163, 4294901760
    %849 = vmatpush.msra.mxu0 %v848
    %v850 = vand.u32 %v161, 4294901760
    %851 = vmatpush.msra.mxu0 %v850
    %v852 = vand.u32 %v159, 4294901760
    %853 = vmatpush.msra.mxu0 %v852
    %v854 = vand.u32 %v157, 4294901760
    %855 = vmatpush.msra.mxu0 %v854
    %v856 = vand.u32 %v155, 4294901760
    %857 = vmatpush.msra.mxu0 %v856
    %v858 = vand.u32 %v153, 4294901760
    %859 = vmatpush.msra.mxu0 %v858
    %v860 = vand.u32 %v151, 4294901760
    %861 = vmatpush.msra.mxu0 %v860
    %v862 = vand.u32 %v149, 4294901760
    %863 = vmatpush.msra.mxu0 %v862
    %v864 = vand.u32 %v184, 4294901760
    %865 = vmatmul.f32.gmra.mxu0 %v864
    %v866 = vpop.f32.mrf.mxu0
    %v867 = vadd.f32 %v830, %v866
    %868 = vdwg.mxu0
    %v869 = vand.u32 %v148, 4294901760
    %870 = vmatpush.msra.mxu0 %v869
    %v871 = vand.u32 %v146, 4294901760
    %872 = vmatpush.msra.mxu0 %v871
    %v873 = vand.u32 %v144, 4294901760
    %874 = vmatpush.msra.mxu0 %v873
    %v875 = vand.u32 %v142, 4294901760
    %876 = vmatpush.msra.mxu0 %v875
    %v877 = vand.u32 %v140, 4294901760
    %878 = vmatpush.msra.mxu0 %v877
    %v879 = vand.u32 %v138, 4294901760
    %880 = vmatpush.msra.mxu0 %v879
    %v881 = vand.u32 %v136, 4294901760
    %882 = vmatpush.msra.mxu0 %v881
    %v883 = vand.u32 %v134, 4294901760
    %884 = vmatpush.msra.mxu0 %v883
    %v885 = vand.u32 %v132, 4294901760
    %886 = vmatpush.msra.mxu0 %v885
    %v887 = vand.u32 %v130, 4294901760
    %888 = vmatpush.msra.mxu0 %v887
    %v889 = vand.u32 %v128, 4294901760
    %890 = vmatpush.msra.mxu0 %v889
    %v891 = vand.u32 %v126, 4294901760
    %892 = vmatpush.msra.mxu0 %v891
    %v893 = vand.u32 %v124, 4294901760
    %894 = vmatpush.msra.mxu0 %v893
    %v895 = vand.u32 %v122, 4294901760
    %896 = vmatpush.msra.mxu0 %v895
    %v897 = vand.u32 %v120, 4294901760
    %898 = vmatpush.msra.mxu0 %v897
    %v899 = vand.u32 %v118, 4294901760
    %900 = vmatpush.msra.mxu0 %v899
    %v901 = vand.u32 %v183, 4294901760
    %v902 = vsub.f32 %v183, %v901
    %v903 = vand.u32 %v902, 4294901760
    %v904 = vsub.f32 %v902, %v903
    %v905 = vand.u32 %v904, 4294901760
    %906 = vmatmul.f32.gmra.mxu0 %v905
    %v907 = vpop.f32.mrf.mxu0
    %v908 = vadd.f32 0.0, %v907
    %909 = vdwg.mxu0
    %v910 = vand.u32 %v148, 4294901760
    %v911 = vsub.f32 %v148, %v910
    %v912 = vand.u32 %v911, 4294901760
    %v913 = vsub.f32 %v911, %v912
    %v914 = vand.u32 %v913, 4294901760
    %915 = vmatpush.msra.mxu0 %v914
    %v916 = vand.u32 %v146, 4294901760
    %v917 = vsub.f32 %v146, %v916
    %v918 = vand.u32 %v917, 4294901760
    %v919 = vsub.f32 %v917, %v918
    %v920 = vand.u32 %v919, 4294901760
    %921 = vmatpush.msra.mxu0 %v920
    %v922 = vand.u32 %v144, 4294901760
    %v923 = vsub.f32 %v144, %v922
    %v924 = vand.u32 %v923, 4294901760
    %v925 = vsub.f32 %v923, %v924
    %v926 = vand.u32 %v925, 4294901760
    %927 = vmatpush.msra.mxu0 %v926
    %v928 = vand.u32 %v142, 4294901760
    %v929 = vsub.f32 %v142, %v928
    %v930 = vand.u32 %v929, 4294901760
    %v931 = vsub.f32 %v929, %v930
    %v932 = vand.u32 %v931, 4294901760
    %933 = vmatpush.msra.mxu0 %v932
    %v934 = vand.u32 %v140, 4294901760
    %v935 = vsub.f32 %v140, %v934
    %v936 = vand.u32 %v935, 4294901760
    %v937 = vsub.f32 %v935, %v936
    %v938 = vand.u32 %v937, 4294901760
    %939 = vmatpush.msra.mxu0 %v938
    %v940 = vand.u32 %v138, 4294901760
    %v941 = vsub.f32 %v138, %v940
    %v942 = vand.u32 %v941, 4294901760
    %v943 = vsub.f32 %v941, %v942
    %v944 = vand.u32 %v943, 4294901760
    %945 = vmatpush.msra.mxu0 %v944
    %v946 = vand.u32 %v136, 4294901760
    %v947 = vsub.f32 %v136, %v946
    %v948 = vand.u32 %v947, 4294901760
    %v949 = vsub.f32 %v947, %v948
    %v950 = vand.u32 %v949, 4294901760
    %951 = vmatpush.msra.mxu0 %v950
    %v952 = vand.u32 %v134, 4294901760
    %v953 = vsub.f32 %v134, %v952
    %v954 = vand.u32 %v953, 4294901760
    %v955 = vsub.f32 %v953, %v954
    %v956 = vand.u32 %v955, 4294901760
    %957 = vmatpush.msra.mxu0 %v956
    %v958 = vand.u32 %v132, 4294901760
    %v959 = vsub.f32 %v132, %v958
    %v960 = vand.u32 %v959, 4294901760
    %v961 = vsub.f32 %v959, %v960
    %v962 = vand.u32 %v961, 4294901760
    %963 = vmatpush.msra.mxu0 %v962
    %v964 = vand.u32 %v130, 4294901760
    %v965 = vsub.f32 %v130, %v964
    %v966 = vand.u32 %v965, 4294901760
    %v967 = vsub.f32 %v965, %v966
    %v968 = vand.u32 %v967, 4294901760
    %969 = vmatpush.msra.mxu0 %v968
    %v970 = vand.u32 %v128, 4294901760
    %v971 = vsub.f32 %v128, %v970
    %v972 = vand.u32 %v971, 4294901760
    %v973 = vsub.f32 %v971, %v972
    %v974 = vand.u32 %v973, 4294901760
    %975 = vmatpush.msra.mxu0 %v974
    %v976 = vand.u32 %v126, 4294901760
    %v977 = vsub.f32 %v126, %v976
    %v978 = vand.u32 %v977, 4294901760
    %v979 = vsub.f32 %v977, %v978
    %v980 = vand.u32 %v979, 4294901760
    %981 = vmatpush.msra.mxu0 %v980
    %v982 = vand.u32 %v124, 4294901760
    %v983 = vsub.f32 %v124, %v982
    %v984 = vand.u32 %v983, 4294901760
    %v985 = vsub.f32 %v983, %v984
    %v986 = vand.u32 %v985, 4294901760
    %987 = vmatpush.msra.mxu0 %v986
    %v988 = vand.u32 %v122, 4294901760
    %v989 = vsub.f32 %v122, %v988
    %v990 = vand.u32 %v989, 4294901760
    %v991 = vsub.f32 %v989, %v990
    %v992 = vand.u32 %v991, 4294901760
    %993 = vmatpush.msra.mxu0 %v992
    %v994 = vand.u32 %v120, 4294901760
    %v995 = vsub.f32 %v120, %v994
    %v996 = vand.u32 %v995, 4294901760
    %v997 = vsub.f32 %v995, %v996
    %v998 = vand.u32 %v997, 4294901760
    %999 = vmatpush.msra.mxu0 %v998
    %v1000 = vand.u32 %v118, 4294901760
    %v1001 = vsub.f32 %v118, %v1000
    %v1002 = vand.u32 %v1001, 4294901760
    %v1003 = vsub.f32 %v1001, %v1002
    %v1004 = vand.u32 %v1003, 4294901760
    %1005 = vmatpush.msra.mxu0 %v1004
    %v1006 = vand.u32 %v183, 4294901760
    %1007 = vmatmul.f32.gmra.mxu0 %v1006
    %v1008 = vpop.f32.mrf.mxu0
    %v1009 = vadd.f32 %v908, %v1008
    %1010 = vdwg.mxu0
    %v1011 = vand.u32 %v148, 4294901760
    %v1012 = vsub.f32 %v148, %v1011
    %1013 = vmatpush.msra.mxu0 %v1012
    %v1014 = vand.u32 %v146, 4294901760
    %v1015 = vsub.f32 %v146, %v1014
    %1016 = vmatpush.msra.mxu0 %v1015
    %v1017 = vand.u32 %v144, 4294901760
    %v1018 = vsub.f32 %v144, %v1017
    %1019 = vmatpush.msra.mxu0 %v1018
    %v1020 = vand.u32 %v142, 4294901760
    %v1021 = vsub.f32 %v142, %v1020
    %1022 = vmatpush.msra.mxu0 %v1021
    %v1023 = vand.u32 %v140, 4294901760
    %v1024 = vsub.f32 %v140, %v1023
    %1025 = vmatpush.msra.mxu0 %v1024
    %v1026 = vand.u32 %v138, 4294901760
    %v1027 = vsub.f32 %v138, %v1026
    %1028 = vmatpush.msra.mxu0 %v1027
    %v1029 = vand.u32 %v136, 4294901760
    %v1030 = vsub.f32 %v136, %v1029
    %1031 = vmatpush.msra.mxu0 %v1030
    %v1032 = vand.u32 %v134, 4294901760
    %v1033 = vsub.f32 %v134, %v1032
    %1034 = vmatpush.msra.mxu0 %v1033
    %v1035 = vand.u32 %v132, 4294901760
    %v1036 = vsub.f32 %v132, %v1035
    %1037 = vmatpush.msra.mxu0 %v1036
    %v1038 = vand.u32 %v130, 4294901760
    %v1039 = vsub.f32 %v130, %v1038
    %1040 = vmatpush.msra.mxu0 %v1039
    %v1041 = vand.u32 %v128, 4294901760
    %v1042 = vsub.f32 %v128, %v1041
    %1043 = vmatpush.msra.mxu0 %v1042
    %v1044 = vand.u32 %v126, 4294901760
    %v1045 = vsub.f32 %v126, %v1044
    %1046 = vmatpush.msra.mxu0 %v1045
    %v1047 = vand.u32 %v124, 4294901760
    %v1048 = vsub.f32 %v124, %v1047
    %1049 = vmatpush.msra.mxu0 %v1048
    %v1050 = vand.u32 %v122, 4294901760
    %v1051 = vsub.f32 %v122, %v1050
    %1052 = vmatpush.msra.mxu0 %v1051
    %v1053 = vand.u32 %v120, 4294901760
    %v1054 = vsub.f32 %v120, %v1053
    %1055 = vmatpush.msra.mxu0 %v1054
    %v1056 = vand.u32 %v118, 4294901760
    %v1057 = vsub.f32 %v118, %v1056
    %1058 = vmatpush.msra.mxu0 %v1057
    %v1059 = vand.u32 %v183, 4294901760
    %v1060 = vsub.f32 %v183, %v1059
    %1061 = vmatmul.f32.gmra.mxu0 %v1060
    %v1062 = vpop.f32.mrf.mxu0
    %v1063 = vadd.f32 %v1009, %v1062
    %1064 = vdwg.mxu0
    %v1065 = vand.u32 %v148, 4294901760
    %1066 = vmatpush.msra.mxu0 %v1065
    %v1067 = vand.u32 %v146, 4294901760
    %1068 = vmatpush.msra.mxu0 %v1067
    %v1069 = vand.u32 %v144, 4294901760
    %1070 = vmatpush.msra.mxu0 %v1069
    %v1071 = vand.u32 %v142, 4294901760
    %1072 = vmatpush.msra.mxu0 %v1071
    %v1073 = vand.u32 %v140, 4294901760
    %1074 = vmatpush.msra.mxu0 %v1073
    %v1075 = vand.u32 %v138, 4294901760
    %1076 = vmatpush.msra.mxu0 %v1075
    %v1077 = vand.u32 %v136, 4294901760
    %1078 = vmatpush.msra.mxu0 %v1077
    %v1079 = vand.u32 %v134, 4294901760
    %1080 = vmatpush.msra.mxu0 %v1079
    %v1081 = vand.u32 %v132, 4294901760
    %1082 = vmatpush.msra.mxu0 %v1081
    %v1083 = vand.u32 %v130, 4294901760
    %1084 = vmatpush.msra.mxu0 %v1083
    %v1085 = vand.u32 %v128, 4294901760
    %1086 = vmatpush.msra.mxu0 %v1085
    %v1087 = vand.u32 %v126, 4294901760
    %1088 = vmatpush.msra.mxu0 %v1087
    %v1089 = vand.u32 %v124, 4294901760
    %1090 = vmatpush.msra.mxu0 %v1089
    %v1091 = vand.u32 %v122, 4294901760
    %1092 = vmatpush.msra.mxu0 %v1091
    %v1093 = vand.u32 %v120, 4294901760
    %1094 = vmatpush.msra.mxu0 %v1093
    %v1095 = vand.u32 %v118, 4294901760
    %1096 = vmatpush.msra.mxu0 %v1095
    %v1097 = vand.u32 %v183, 4294901760
    %v1098 = vsub.f32 %v183, %v1097
    %v1099 = vand.u32 %v1098, 4294901760
    %1100 = vmatmul.f32.gmra.mxu0 %v1099
    %v1101 = vpop.f32.mrf.mxu0
    %v1102 = vadd.f32 %v1063, %v1101
    %1103 = vdwg.mxu0
    %v1104 = vand.u32 %v148, 4294901760
    %v1105 = vsub.f32 %v148, %v1104
    %v1106 = vand.u32 %v1105, 4294901760
    %1107 = vmatpush.msra.mxu0 %v1106
    %v1108 = vand.u32 %v146, 4294901760
    %v1109 = vsub.f32 %v146, %v1108
    %v1110 = vand.u32 %v1109, 4294901760
    %1111 = vmatpush.msra.mxu0 %v1110
    %v1112 = vand.u32 %v144, 4294901760
    %v1113 = vsub.f32 %v144, %v1112
    %v1114 = vand.u32 %v1113, 4294901760
    %1115 = vmatpush.msra.mxu0 %v1114
    %v1116 = vand.u32 %v142, 4294901760
    %v1117 = vsub.f32 %v142, %v1116
    %v1118 = vand.u32 %v1117, 4294901760
    %1119 = vmatpush.msra.mxu0 %v1118
    %v1120 = vand.u32 %v140, 4294901760
    %v1121 = vsub.f32 %v140, %v1120
    %v1122 = vand.u32 %v1121, 4294901760
    %1123 = vmatpush.msra.mxu0 %v1122
    %v1124 = vand.u32 %v138, 4294901760
    %v1125 = vsub.f32 %v138, %v1124
    %v1126 = vand.u32 %v1125, 4294901760
    %1127 = vmatpush.msra.mxu0 %v1126
    %v1128 = vand.u32 %v136, 4294901760
    %v1129 = vsub.f32 %v136, %v1128
    %v1130 = vand.u32 %v1129, 4294901760
    %1131 = vmatpush.msra.mxu0 %v1130
    %v1132 = vand.u32 %v134, 4294901760
    %v1133 = vsub.f32 %v134, %v1132
    %v1134 = vand.u32 %v1133, 4294901760
    %1135 = vmatpush.msra.mxu0 %v1134
    %v1136 = vand.u32 %v132, 4294901760
    %v1137 = vsub.f32 %v132, %v1136
    %v1138 = vand.u32 %v1137, 4294901760
    %1139 = vmatpush.msra.mxu0 %v1138
    %v1140 = vand.u32 %v130, 4294901760
    %v1141 = vsub.f32 %v130, %v1140
    %v1142 = vand.u32 %v1141, 4294901760
    %1143 = vmatpush.msra.mxu0 %v1142
    %v1144 = vand.u32 %v128, 4294901760
    %v1145 = vsub.f32 %v128, %v1144
    %v1146 = vand.u32 %v1145, 4294901760
    %1147 = vmatpush.msra.mxu0 %v1146
    %v1148 = vand.u32 %v126, 4294901760
    %v1149 = vsub.f32 %v126, %v1148
    %v1150 = vand.u32 %v1149, 4294901760
    %1151 = vmatpush.msra.mxu0 %v1150
    %v1152 = vand.u32 %v124, 4294901760
    %v1153 = vsub.f32 %v124, %v1152
    %v1154 = vand.u32 %v1153, 4294901760
    %1155 = vmatpush.msra.mxu0 %v1154
    %v1156 = vand.u32 %v122, 4294901760
    %v1157 = vsub.f32 %v122, %v1156
    %v1158 = vand.u32 %v1157, 4294901760
    %1159 = vmatpush.msra.mxu0 %v1158
    %v1160 = vand.u32 %v120, 4294901760
    %v1161 = vsub.f32 %v120, %v1160
    %v1162 = vand.u32 %v1161, 4294901760
    %1163 = vmatpush.msra.mxu0 %v1162
    %v1164 = vand.u32 %v118, 4294901760
    %v1165 = vsub.f32 %v118, %v1164
    %v1166 = vand.u32 %v1165, 4294901760
    %1167 = vmatpush.msra.mxu0 %v1166
    %v1168 = vand.u32 %v183, 4294901760
    %1169 = vmatmul.f32.gmra.mxu0 %v1168
    %v1170 = vpop.f32.mrf.mxu0
    %v1171 = vadd.f32 %v1102, %v1170
    %1172 = vdwg.mxu0
    %v1173 = vand.u32 %v148, 4294901760
    %1174 = vmatpush.msra.mxu0 %v1173
    %v1175 = vand.u32 %v146, 4294901760
    %1176 = vmatpush.msra.mxu0 %v1175
    %v1177 = vand.u32 %v144, 4294901760
    %1178 = vmatpush.msra.mxu0 %v1177
    %v1179 = vand.u32 %v142, 4294901760
    %1180 = vmatpush.msra.mxu0 %v1179
    %v1181 = vand.u32 %v140, 4294901760
    %1182 = vmatpush.msra.mxu0 %v1181
    %v1183 = vand.u32 %v138, 4294901760
    %1184 = vmatpush.msra.mxu0 %v1183
    %v1185 = vand.u32 %v136, 4294901760
    %1186 = vmatpush.msra.mxu0 %v1185
    %v1187 = vand.u32 %v134, 4294901760
    %1188 = vmatpush.msra.mxu0 %v1187
    %v1189 = vand.u32 %v132, 4294901760
    %1190 = vmatpush.msra.mxu0 %v1189
    %v1191 = vand.u32 %v130, 4294901760
    %1192 = vmatpush.msra.mxu0 %v1191
    %v1193 = vand.u32 %v128, 4294901760
    %1194 = vmatpush.msra.mxu0 %v1193
    %v1195 = vand.u32 %v126, 4294901760
    %1196 = vmatpush.msra.mxu0 %v1195
    %v1197 = vand.u32 %v124, 4294901760
    %1198 = vmatpush.msra.mxu0 %v1197
    %v1199 = vand.u32 %v122, 4294901760
    %1200 = vmatpush.msra.mxu0 %v1199
    %v1201 = vand.u32 %v120, 4294901760
    %1202 = vmatpush.msra.mxu0 %v1201
    %v1203 = vand.u32 %v118, 4294901760
    %1204 = vmatpush.msra.mxu0 %v1203
    %v1205 = vand.u32 %v183, 4294901760
    %1206 = vmatmul.f32.gmra.mxu0 %v1205
    %v1207 = vpop.f32.mrf.mxu0
    %v1208 = vadd.f32 %v1171, %v1207
    %1209 = vdwg.mxu0
    %v1210 = vand.u32 %v180, 4294901760
    %1211 = vmatpush.msra.mxu0 %v1210
    %v1212 = vand.u32 %v178, 4294901760
    %1213 = vmatpush.msra.mxu0 %v1212
    %v1214 = vand.u32 %v176, 4294901760
    %1215 = vmatpush.msra.mxu0 %v1214
    %v1216 = vand.u32 %v174, 4294901760
    %1217 = vmatpush.msra.mxu0 %v1216
    %v1218 = vand.u32 %v172, 4294901760
    %1219 = vmatpush.msra.mxu0 %v1218
    %v1220 = vand.u32 %v170, 4294901760
    %1221 = vmatpush.msra.mxu0 %v1220
    %v1222 = vand.u32 %v168, 4294901760
    %1223 = vmatpush.msra.mxu0 %v1222
    %v1224 = vand.u32 %v166, 4294901760
    %1225 = vmatpush.msra.mxu0 %v1224
    %v1226 = vand.u32 %v164, 4294901760
    %1227 = vmatpush.msra.mxu0 %v1226
    %v1228 = vand.u32 %v162, 4294901760
    %1229 = vmatpush.msra.mxu0 %v1228
    %v1230 = vand.u32 %v160, 4294901760
    %1231 = vmatpush.msra.mxu0 %v1230
    %v1232 = vand.u32 %v158, 4294901760
    %1233 = vmatpush.msra.mxu0 %v1232
    %v1234 = vand.u32 %v156, 4294901760
    %1235 = vmatpush.msra.mxu0 %v1234
    %v1236 = vand.u32 %v154, 4294901760
    %1237 = vmatpush.msra.mxu0 %v1236
    %v1238 = vand.u32 %v152, 4294901760
    %1239 = vmatpush.msra.mxu0 %v1238
    %v1240 = vand.u32 %v150, 4294901760
    %1241 = vmatpush.msra.mxu0 %v1240
    %v1242 = vand.u32 %v184, 4294901760
    %v1243 = vsub.f32 %v184, %v1242
    %v1244 = vand.u32 %v1243, 4294901760
    %v1245 = vsub.f32 %v1243, %v1244
    %v1246 = vand.u32 %v1245, 4294901760
    %1247 = vmatmul.f32.gmra.mxu0 %v1246
    %v1248 = vpop.f32.mrf.mxu0
    %v1249 = vadd.f32 %v1208, %v1248
    %1250 = vdwg.mxu0
    %v1251 = vand.u32 %v180, 4294901760
    %v1252 = vsub.f32 %v180, %v1251
    %v1253 = vand.u32 %v1252, 4294901760
    %v1254 = vsub.f32 %v1252, %v1253
    %v1255 = vand.u32 %v1254, 4294901760
    %1256 = vmatpush.msra.mxu0 %v1255
    %v1257 = vand.u32 %v178, 4294901760
    %v1258 = vsub.f32 %v178, %v1257
    %v1259 = vand.u32 %v1258, 4294901760
    %v1260 = vsub.f32 %v1258, %v1259
    %v1261 = vand.u32 %v1260, 4294901760
    %1262 = vmatpush.msra.mxu0 %v1261
    %v1263 = vand.u32 %v176, 4294901760
    %v1264 = vsub.f32 %v176, %v1263
    %v1265 = vand.u32 %v1264, 4294901760
    %v1266 = vsub.f32 %v1264, %v1265
    %v1267 = vand.u32 %v1266, 4294901760
    %1268 = vmatpush.msra.mxu0 %v1267
    %v1269 = vand.u32 %v174, 4294901760
    %v1270 = vsub.f32 %v174, %v1269
    %v1271 = vand.u32 %v1270, 4294901760
    %v1272 = vsub.f32 %v1270, %v1271
    %v1273 = vand.u32 %v1272, 4294901760
    %1274 = vmatpush.msra.mxu0 %v1273
    %v1275 = vand.u32 %v172, 4294901760
    %v1276 = vsub.f32 %v172, %v1275
    %v1277 = vand.u32 %v1276, 4294901760
    %v1278 = vsub.f32 %v1276, %v1277
    %v1279 = vand.u32 %v1278, 4294901760
    %1280 = vmatpush.msra.mxu0 %v1279
    %v1281 = vand.u32 %v170, 4294901760
    %v1282 = vsub.f32 %v170, %v1281
    %v1283 = vand.u32 %v1282, 4294901760
    %v1284 = vsub.f32 %v1282, %v1283
    %v1285 = vand.u32 %v1284, 4294901760
    %1286 = vmatpush.msra.mxu0 %v1285
    %v1287 = vand.u32 %v168, 4294901760
    %v1288 = vsub.f32 %v168, %v1287
    %v1289 = vand.u32 %v1288, 4294901760
    %v1290 = vsub.f32 %v1288, %v1289
    %v1291 = vand.u32 %v1290, 4294901760
    %1292 = vmatpush.msra.mxu0 %v1291
    %v1293 = vand.u32 %v166, 4294901760
    %v1294 = vsub.f32 %v166, %v1293
    %v1295 = vand.u32 %v1294, 4294901760
    %v1296 = vsub.f32 %v1294, %v1295
    %v1297 = vand.u32 %v1296, 4294901760
    %1298 = vmatpush.msra.mxu0 %v1297
    %v1299 = vand.u32 %v164, 4294901760
    %v1300 = vsub.f32 %v164, %v1299
    %v1301 = vand.u32 %v1300, 4294901760
    %v1302 = vsub.f32 %v1300, %v1301
    %v1303 = vand.u32 %v1302, 4294901760
    %1304 = vmatpush.msra.mxu0 %v1303
    %v1305 = vand.u32 %v162, 4294901760
    %v1306 = vsub.f32 %v162, %v1305
    %v1307 = vand.u32 %v1306, 4294901760
    %v1308 = vsub.f32 %v1306, %v1307
    %v1309 = vand.u32 %v1308, 4294901760
    %1310 = vmatpush.msra.mxu0 %v1309
    %v1311 = vand.u32 %v160, 4294901760
    %v1312 = vsub.f32 %v160, %v1311
    %v1313 = vand.u32 %v1312, 4294901760
    %v1314 = vsub.f32 %v1312, %v1313
    %v1315 = vand.u32 %v1314, 4294901760
    %1316 = vmatpush.msra.mxu0 %v1315
    %v1317 = vand.u32 %v158, 4294901760
    %v1318 = vsub.f32 %v158, %v1317
    %v1319 = vand.u32 %v1318, 4294901760
    %v1320 = vsub.f32 %v1318, %v1319
    %v1321 = vand.u32 %v1320, 4294901760
    %1322 = vmatpush.msra.mxu0 %v1321
    %v1323 = vand.u32 %v156, 4294901760
    %v1324 = vsub.f32 %v156, %v1323
    %v1325 = vand.u32 %v1324, 4294901760
    %v1326 = vsub.f32 %v1324, %v1325
    %v1327 = vand.u32 %v1326, 4294901760
    %1328 = vmatpush.msra.mxu0 %v1327
    %v1329 = vand.u32 %v154, 4294901760
    %v1330 = vsub.f32 %v154, %v1329
    %v1331 = vand.u32 %v1330, 4294901760
    %v1332 = vsub.f32 %v1330, %v1331
    %v1333 = vand.u32 %v1332, 4294901760
    %1334 = vmatpush.msra.mxu0 %v1333
    %v1335 = vand.u32 %v152, 4294901760
    %v1336 = vsub.f32 %v152, %v1335
    %v1337 = vand.u32 %v1336, 4294901760
    %v1338 = vsub.f32 %v1336, %v1337
    %v1339 = vand.u32 %v1338, 4294901760
    %1340 = vmatpush.msra.mxu0 %v1339
    %v1341 = vand.u32 %v150, 4294901760
    %v1342 = vsub.f32 %v150, %v1341
    %v1343 = vand.u32 %v1342, 4294901760
    %v1344 = vsub.f32 %v1342, %v1343
    %v1345 = vand.u32 %v1344, 4294901760
    %1346 = vmatpush.msra.mxu0 %v1345
    %v1347 = vand.u32 %v184, 4294901760
    %1348 = vmatmul.f32.gmra.mxu0 %v1347
    %v1349 = vpop.f32.mrf.mxu0
    %v1350 = vadd.f32 %v1249, %v1349
    %1351 = vdwg.mxu0
    %v1352 = vand.u32 %v180, 4294901760
    %v1353 = vsub.f32 %v180, %v1352
    %1354 = vmatpush.msra.mxu0 %v1353
    %v1355 = vand.u32 %v178, 4294901760
    %v1356 = vsub.f32 %v178, %v1355
    %1357 = vmatpush.msra.mxu0 %v1356
    %v1358 = vand.u32 %v176, 4294901760
    %v1359 = vsub.f32 %v176, %v1358
    %1360 = vmatpush.msra.mxu0 %v1359
    %v1361 = vand.u32 %v174, 4294901760
    %v1362 = vsub.f32 %v174, %v1361
    %1363 = vmatpush.msra.mxu0 %v1362
    %v1364 = vand.u32 %v172, 4294901760
    %v1365 = vsub.f32 %v172, %v1364
    %1366 = vmatpush.msra.mxu0 %v1365
    %v1367 = vand.u32 %v170, 4294901760
    %v1368 = vsub.f32 %v170, %v1367
    %1369 = vmatpush.msra.mxu0 %v1368
    %v1370 = vand.u32 %v168, 4294901760
    %v1371 = vsub.f32 %v168, %v1370
    %1372 = vmatpush.msra.mxu0 %v1371
    %v1373 = vand.u32 %v166, 4294901760
    %v1374 = vsub.f32 %v166, %v1373
    %1375 = vmatpush.msra.mxu0 %v1374
    %v1376 = vand.u32 %v164, 4294901760
    %v1377 = vsub.f32 %v164, %v1376
    %1378 = vmatpush.msra.mxu0 %v1377
    %v1379 = vand.u32 %v162, 4294901760
    %v1380 = vsub.f32 %v162, %v1379
    %1381 = vmatpush.msra.mxu0 %v1380
    %v1382 = vand.u32 %v160, 4294901760
    %v1383 = vsub.f32 %v160, %v1382
    %1384 = vmatpush.msra.mxu0 %v1383
    %v1385 = vand.u32 %v158, 4294901760
    %v1386 = vsub.f32 %v158, %v1385
    %1387 = vmatpush.msra.mxu0 %v1386
    %v1388 = vand.u32 %v156, 4294901760
    %v1389 = vsub.f32 %v156, %v1388
    %1390 = vmatpush.msra.mxu0 %v1389
    %v1391 = vand.u32 %v154, 4294901760
    %v1392 = vsub.f32 %v154, %v1391
    %1393 = vmatpush.msra.mxu0 %v1392
    %v1394 = vand.u32 %v152, 4294901760
    %v1395 = vsub.f32 %v152, %v1394
    %1396 = vmatpush.msra.mxu0 %v1395
    %v1397 = vand.u32 %v150, 4294901760
    %v1398 = vsub.f32 %v150, %v1397
    %1399 = vmatpush.msra.mxu0 %v1398
    %v1400 = vand.u32 %v184, 4294901760
    %v1401 = vsub.f32 %v184, %v1400
    %1402 = vmatmul.f32.gmra.mxu0 %v1401
    %v1403 = vpop.f32.mrf.mxu0
    %v1404 = vadd.f32 %v1350, %v1403
    %1405 = vdwg.mxu0
    %v1406 = vand.u32 %v180, 4294901760
    %1407 = vmatpush.msra.mxu0 %v1406
    %v1408 = vand.u32 %v178, 4294901760
    %1409 = vmatpush.msra.mxu0 %v1408
    %v1410 = vand.u32 %v176, 4294901760
    %1411 = vmatpush.msra.mxu0 %v1410
    %v1412 = vand.u32 %v174, 4294901760
    %1413 = vmatpush.msra.mxu0 %v1412
    %v1414 = vand.u32 %v172, 4294901760
    %1415 = vmatpush.msra.mxu0 %v1414
    %v1416 = vand.u32 %v170, 4294901760
    %1417 = vmatpush.msra.mxu0 %v1416
    %v1418 = vand.u32 %v168, 4294901760
    %1419 = vmatpush.msra.mxu0 %v1418
    %v1420 = vand.u32 %v166, 4294901760
    %1421 = vmatpush.msra.mxu0 %v1420
    %v1422 = vand.u32 %v164, 4294901760
    %1423 = vmatpush.msra.mxu0 %v1422
    %v1424 = vand.u32 %v162, 4294901760
    %1425 = vmatpush.msra.mxu0 %v1424
    %v1426 = vand.u32 %v160, 4294901760
    %1427 = vmatpush.msra.mxu0 %v1426
    %v1428 = vand.u32 %v158, 4294901760
    %1429 = vmatpush.msra.mxu0 %v1428
    %v1430 = vand.u32 %v156, 4294901760
    %1431 = vmatpush.msra.mxu0 %v1430
    %v1432 = vand.u32 %v154, 4294901760
    %1433 = vmatpush.msra.mxu0 %v1432
    %v1434 = vand.u32 %v152, 4294901760
    %1435 = vmatpush.msra.mxu0 %v1434
    %v1436 = vand.u32 %v150, 4294901760
    %1437 = vmatpush.msra.mxu0 %v1436
    %v1438 = vand.u32 %v184, 4294901760
    %v1439 = vsub.f32 %v184, %v1438
    %v1440 = vand.u32 %v1439, 4294901760
    %1441 = vmatmul.f32.gmra.mxu0 %v1440
    %v1442 = vpop.f32.mrf.mxu0
    %v1443 = vadd.f32 %v1404, %v1442
    %1444 = vdwg.mxu0
    %v1445 = vand.u32 %v180, 4294901760
    %v1446 = vsub.f32 %v180, %v1445
    %v1447 = vand.u32 %v1446, 4294901760
    %1448 = vmatpush.msra.mxu0 %v1447
    %v1449 = vand.u32 %v178, 4294901760
    %v1450 = vsub.f32 %v178, %v1449
    %v1451 = vand.u32 %v1450, 4294901760
    %1452 = vmatpush.msra.mxu0 %v1451
    %v1453 = vand.u32 %v176, 4294901760
    %v1454 = vsub.f32 %v176, %v1453
    %v1455 = vand.u32 %v1454, 4294901760
    %1456 = vmatpush.msra.mxu0 %v1455
    %v1457 = vand.u32 %v174, 4294901760
    %v1458 = vsub.f32 %v174, %v1457
    %v1459 = vand.u32 %v1458, 4294901760
    %1460 = vmatpush.msra.mxu0 %v1459
    %v1461 = vand.u32 %v172, 4294901760
    %v1462 = vsub.f32 %v172, %v1461
    %v1463 = vand.u32 %v1462, 4294901760
    %1464 = vmatpush.msra.mxu0 %v1463
    %v1465 = vand.u32 %v170, 4294901760
    %v1466 = vsub.f32 %v170, %v1465
    %v1467 = vand.u32 %v1466, 4294901760
    %1468 = vmatpush.msra.mxu0 %v1467
    %v1469 = vand.u32 %v168, 4294901760
    %v1470 = vsub.f32 %v168, %v1469
    %v1471 = vand.u32 %v1470, 4294901760
    %1472 = vmatpush.msra.mxu0 %v1471
    %v1473 = vand.u32 %v166, 4294901760
    %v1474 = vsub.f32 %v166, %v1473
    %v1475 = vand.u32 %v1474, 4294901760
    %1476 = vmatpush.msra.mxu0 %v1475
    %v1477 = vand.u32 %v164, 4294901760
    %v1478 = vsub.f32 %v164, %v1477
    %v1479 = vand.u32 %v1478, 4294901760
    %1480 = vmatpush.msra.mxu0 %v1479
    %v1481 = vand.u32 %v162, 4294901760
    %v1482 = vsub.f32 %v162, %v1481
    %v1483 = vand.u32 %v1482, 4294901760
    %1484 = vmatpush.msra.mxu0 %v1483
    %v1485 = vand.u32 %v160, 4294901760
    %v1486 = vsub.f32 %v160, %v1485
    %v1487 = vand.u32 %v1486, 4294901760
    %1488 = vmatpush.msra.mxu0 %v1487
    %v1489 = vand.u32 %v158, 4294901760
    %v1490 = vsub.f32 %v158, %v1489
    %v1491 = vand.u32 %v1490, 4294901760
    %1492 = vmatpush.msra.mxu0 %v1491
    %v1493 = vand.u32 %v156, 4294901760
    %v1494 = vsub.f32 %v156, %v1493
    %v1495 = vand.u32 %v1494, 4294901760
    %1496 = vmatpush.msra.mxu0 %v1495
    %v1497 = vand.u32 %v154, 4294901760
    %v1498 = vsub.f32 %v154, %v1497
    %v1499 = vand.u32 %v1498, 4294901760
    %1500 = vmatpush.msra.mxu0 %v1499
    %v1501 = vand.u32 %v152, 4294901760
    %v1502 = vsub.f32 %v152, %v1501
    %v1503 = vand.u32 %v1502, 4294901760
    %1504 = vmatpush.msra.mxu0 %v1503
    %v1505 = vand.u32 %v150, 4294901760
    %v1506 = vsub.f32 %v150, %v1505
    %v1507 = vand.u32 %v1506, 4294901760
    %1508 = vmatpush.msra.mxu0 %v1507
    %v1509 = vand.u32 %v184, 4294901760
    %1510 = vmatmul.f32.gmra.mxu0 %v1509
    %v1511 = vpop.f32.mrf.mxu0
    %v1512 = vadd.f32 %v1443, %v1511
    %1513 = vdwg.mxu0
    %v1514 = vand.u32 %v180, 4294901760
    %1515 = vmatpush.msra.mxu0 %v1514
    %v1516 = vand.u32 %v178, 4294901760
    %1517 = vmatpush.msra.mxu0 %v1516
    %v1518 = vand.u32 %v176, 4294901760
    %1519 = vmatpush.msra.mxu0 %v1518
    %v1520 = vand.u32 %v174, 4294901760
    %1521 = vmatpush.msra.mxu0 %v1520
    %v1522 = vand.u32 %v172, 4294901760
    %1523 = vmatpush.msra.mxu0 %v1522
    %v1524 = vand.u32 %v170, 4294901760
    %1525 = vmatpush.msra.mxu0 %v1524
    %v1526 = vand.u32 %v168, 4294901760
    %1527 = vmatpush.msra.mxu0 %v1526
    %v1528 = vand.u32 %v166, 4294901760
    %1529 = vmatpush.msra.mxu0 %v1528
    %v1530 = vand.u32 %v164, 4294901760
    %1531 = vmatpush.msra.mxu0 %v1530
    %v1532 = vand.u32 %v162, 4294901760
    %1533 = vmatpush.msra.mxu0 %v1532
    %v1534 = vand.u32 %v160, 4294901760
    %1535 = vmatpush.msra.mxu0 %v1534
    %v1536 = vand.u32 %v158, 4294901760
    %1537 = vmatpush.msra.mxu0 %v1536
    %v1538 = vand.u32 %v156, 4294901760
    %1539 = vmatpush.msra.mxu0 %v1538
    %v1540 = vand.u32 %v154, 4294901760
    %1541 = vmatpush.msra.mxu0 %v1540
    %v1542 = vand.u32 %v152, 4294901760
    %1543 = vmatpush.msra.mxu0 %v1542
    %v1544 = vand.u32 %v150, 4294901760
    %1545 = vmatpush.msra.mxu0 %v1544
    %v1546 = vand.u32 %v184, 4294901760
    %1547 = vmatmul.f32.gmra.mxu0 %v1546
    %v1548 = vpop.f32.mrf.mxu0
    %v1549 = vadd.f32 %v1512, %v1548
    %1550 = vdwg.mxu0
    %1552 = vst [vmem:[#allocation1] ss:$4 sm:$0xff] %v52
    %v1553 = vld.sshfl [vmem:[#allocation1] sm:$0xff pattern:$0x73625140]
    %v1554 = vld.sshfl [vmem:[#allocation1 + $0x8] sm:$0xff pattern:$0x73625140]
    %v1557 = vand.u32 %v83, 4294901760
    %1558 = vmatpush.msra.mxu0 %v1557
    %v1559 = vand.u32 %v81, 4294901760
    %1560 = vmatpush.msra.mxu0 %v1559
    %v1561 = vand.u32 %v79, 4294901760
    %1562 = vmatpush.msra.mxu0 %v1561
    %v1563 = vand.u32 %v77, 4294901760
    %1564 = vmatpush.msra.mxu0 %v1563
    %v1565 = vand.u32 %v75, 4294901760
    %1566 = vmatpush.msra.mxu0 %v1565
    %v1567 = vand.u32 %v73, 4294901760
    %1568 = vmatpush.msra.mxu0 %v1567
    %v1569 = vand.u32 %v71, 4294901760
    %1570 = vmatpush.msra.mxu0 %v1569
    %v1571 = vand.u32 %v69, 4294901760
    %1572 = vmatpush.msra.mxu0 %v1571
    %v1573 = vand.u32 %v67, 4294901760
    %1574 = vmatpush.msra.mxu0 %v1573
    %v1575 = vand.u32 %v65, 4294901760
    %1576 = vmatpush.msra.mxu0 %v1575
    %v1577 = vand.u32 %v63, 4294901760
    %1578 = vmatpush.msra.mxu0 %v1577
    %v1579 = vand.u32 %v61, 4294901760
    %1580 = vmatpush.msra.mxu0 %v1579
    %v1581 = vand.u32 %v59, 4294901760
    %1582 = vmatpush.msra.mxu0 %v1581
    %v1583 = vand.u32 %v57, 4294901760
    %1584 = vmatpush.msra.mxu0 %v1583
    %v1585 = vand.u32 %v55, 4294901760
    %1586 = vmatpush.msra.mxu0 %v1585
    %v1587 = vand.u32 %v53, 4294901760
    %1588 = vmatpush.msra.mxu0 %v1587
    %v1589 = vand.u32 %v1553, 4294901760
    %v1590 = vsub.f32 %v1553, %v1589
    %v1591 = vand.u32 %v1590, 4294901760
    %v1592 = vsub.f32 %v1590, %v1591
    %v1593 = vand.u32 %v1592, 4294901760
    %1594 = vmatmul.f32.gmra.mxu0 %v1593
    %v1595 = vpop.f32.mrf.mxu0
    %v1596 = vadd.f32 %v867, %v1595
    %1597 = vdwg.mxu0
    %v1598 = vand.u32 %v83, 4294901760
    %v1599 = vsub.f32 %v83, %v1598
    %v1600 = vand.u32 %v1599, 4294901760
    %v1601 = vsub.f32 %v1599, %v1600
    %v1602 = vand.u32 %v1601, 4294901760
    %1603 = vmatpush.msra.mxu0 %v1602
    %v1604 = vand.u32 %v81, 4294901760
    %v1605 = vsub.f32 %v81, %v1604
    %v1606 = vand.u32 %v1605, 4294901760
    %v1607 = vsub.f32 %v1605, %v1606
    %v1608 = vand.u32 %v1607, 4294901760
    %1609 = vmatpush.msra.mxu0 %v1608
    %v1610 = vand.u32 %v79, 4294901760
    %v1611 = vsub.f32 %v79, %v1610
    %v1612 = vand.u32 %v1611, 4294901760
    %v1613 = vsub.f32 %v1611, %v1612
    %v1614 = vand.u32 %v1613, 4294901760
    %1615 = vmatpush.msra.mxu0 %v1614
    %v1616 = vand.u32 %v77, 4294901760
    %v1617 = vsub.f32 %v77, %v1616
    %v1618 = vand.u32 %v1617, 4294901760
    %v1619 = vsub.f32 %v1617, %v1618
    %v1620 = vand.u32 %v1619, 4294901760
    %1621 = vmatpush.msra.mxu0 %v1620
    %v1622 = vand.u32 %v75, 4294901760
    %v1623 = vsub.f32 %v75, %v1622
    %v1624 = vand.u32 %v1623, 4294901760
    %v1625 = vsub.f32 %v1623, %v1624
    %v1626 = vand.u32 %v1625, 4294901760
    %1627 = vmatpush.msra.mxu0 %v1626
    %v1628 = vand.u32 %v73, 4294901760
    %v1629 = vsub.f32 %v73, %v1628
    %v1630 = vand.u32 %v1629, 4294901760
    %v1631 = vsub.f32 %v1629, %v1630
    %v1632 = vand.u32 %v1631, 4294901760
    %1633 = vmatpush.msra.mxu0 %v1632
    %v1634 = vand.u32 %v71, 4294901760
    %v1635 = vsub.f32 %v71, %v1634
    %v1636 = vand.u32 %v1635, 4294901760
    %v1637 = vsub.f32 %v1635, %v1636
    %v1638 = vand.u32 %v1637, 4294901760
    %1639 = vmatpush.msra.mxu0 %v1638
    %v1640 = vand.u32 %v69, 4294901760
    %v1641 = vsub.f32 %v69, %v1640
    %v1642 = vand.u32 %v1641, 4294901760
    %v1643 = vsub.f32 %v1641, %v1642
    %v1644 = vand.u32 %v1643, 4294901760
    %1645 = vmatpush.msra.mxu0 %v1644
    %v1646 = vand.u32 %v67, 4294901760
    %v1647 = vsub.f32 %v67, %v1646
    %v1648 = vand.u32 %v1647, 4294901760
    %v1649 = vsub.f32 %v1647, %v1648
    %v1650 = vand.u32 %v1649, 4294901760
    %1651 = vmatpush.msra.mxu0 %v1650
    %v1652 = vand.u32 %v65, 4294901760
    %v1653 = vsub.f32 %v65, %v1652
    %v1654 = vand.u32 %v1653, 4294901760
    %v1655 = vsub.f32 %v1653, %v1654
    %v1656 = vand.u32 %v1655, 4294901760
    %1657 = vmatpush.msra.mxu0 %v1656
    %v1658 = vand.u32 %v63, 4294901760
    %v1659 = vsub.f32 %v63, %v1658
    %v1660 = vand.u32 %v1659, 4294901760
    %v1661 = vsub.f32 %v1659, %v1660
    %v1662 = vand.u32 %v1661, 4294901760
    %1663 = vmatpush.msra.mxu0 %v1662
    %v1664 = vand.u32 %v61, 4294901760
    %v1665 = vsub.f32 %v61, %v1664
    %v1666 = vand.u32 %v1665, 4294901760
    %v1667 = vsub.f32 %v1665, %v1666
    %v1668 = vand.u32 %v1667, 4294901760
    %1669 = vmatpush.msra.mxu0 %v1668
    %v1670 = vand.u32 %v59, 4294901760
    %v1671 = vsub.f32 %v59, %v1670
    %v1672 = vand.u32 %v1671, 4294901760
    %v1673 = vsub.f32 %v1671, %v1672
    %v1674 = vand.u32 %v1673, 4294901760
    %1675 = vmatpush.msra.mxu0 %v1674
    %v1676 = vand.u32 %v57, 4294901760
    %v1677 = vsub.f32 %v57, %v1676
    %v1678 = vand.u32 %v1677, 4294901760
    %v1679 = vsub.f32 %v1677, %v1678
    %v1680 = vand.u32 %v1679, 4294901760
    %1681 = vmatpush.msra.mxu0 %v1680
    %v1682 = vand.u32 %v55, 4294901760
    %v1683 = vsub.f32 %v55, %v1682
    %v1684 = vand.u32 %v1683, 4294901760
    %v1685 = vsub.f32 %v1683, %v1684
    %v1686 = vand.u32 %v1685, 4294901760
    %1687 = vmatpush.msra.mxu0 %v1686
    %v1688 = vand.u32 %v53, 4294901760
    %v1689 = vsub.f32 %v53, %v1688
    %v1690 = vand.u32 %v1689, 4294901760
    %v1691 = vsub.f32 %v1689, %v1690
    %v1692 = vand.u32 %v1691, 4294901760
    %1693 = vmatpush.msra.mxu0 %v1692
    %v1694 = vand.u32 %v1553, 4294901760
    %1695 = vmatmul.f32.gmra.mxu0 %v1694
    %v1696 = vpop.f32.mrf.mxu0
    %v1697 = vadd.f32 %v1596, %v1696
    %1698 = vdwg.mxu0
    %v1699 = vand.u32 %v83, 4294901760
    %v1700 = vsub.f32 %v83, %v1699
    %1701 = vmatpush.msra.mxu0 %v1700
    %v1702 = vand.u32 %v81, 4294901760
    %v1703 = vsub.f32 %v81, %v1702
    %1704 = vmatpush.msra.mxu0 %v1703
    %v1705 = vand.u32 %v79, 4294901760
    %v1706 = vsub.f32 %v79, %v1705
    %1707 = vmatpush.msra.mxu0 %v1706
    %v1708 = vand.u32 %v77, 4294901760
    %v1709 = vsub.f32 %v77, %v1708
    %1710 = vmatpush.msra.mxu0 %v1709
    %v1711 = vand.u32 %v75, 4294901760
    %v1712 = vsub.f32 %v75, %v1711
    %1713 = vmatpush.msra.mxu0 %v1712
    %v1714 = vand.u32 %v73, 4294901760
    %v1715 = vsub.f32 %v73, %v1714
    %1716 = vmatpush.msra.mxu0 %v1715
    %v1717 = vand.u32 %v71, 4294901760
    %v1718 = vsub.f32 %v71, %v1717
    %1719 = vmatpush.msra.mxu0 %v1718
    %v1720 = vand.u32 %v69, 4294901760
    %v1721 = vsub.f32 %v69, %v1720
    %1722 = vmatpush.msra.mxu0 %v1721
    %v1723 = vand.u32 %v67, 4294901760
    %v1724 = vsub.f32 %v67, %v1723
    %1725 = vmatpush.msra.mxu0 %v1724
    %v1726 = vand.u32 %v65, 4294901760
    %v1727 = vsub.f32 %v65, %v1726
    %1728 = vmatpush.msra.mxu0 %v1727
    %v1729 = vand.u32 %v63, 4294901760
    %v1730 = vsub.f32 %v63, %v1729
    %1731 = vmatpush.msra.mxu0 %v1730
    %v1732 = vand.u32 %v61, 4294901760
    %v1733 = vsub.f32 %v61, %v1732
    %1734 = vmatpush.msra.mxu0 %v1733
    %v1735 = vand.u32 %v59, 4294901760
    %v1736 = vsub.f32 %v59, %v1735
    %1737 = vmatpush.msra.mxu0 %v1736
    %v1738 = vand.u32 %v57, 4294901760
    %v1739 = vsub.f32 %v57, %v1738
    %1740 = vmatpush.msra.mxu0 %v1739
    %v1741 = vand.u32 %v55, 4294901760
    %v1742 = vsub.f32 %v55, %v1741
    %1743 = vmatpush.msra.mxu0 %v1742
    %v1744 = vand.u32 %v53, 4294901760
    %v1745 = vsub.f32 %v53, %v1744
    %1746 = vmatpush.msra.mxu0 %v1745
    %v1747 = vand.u32 %v1553, 4294901760
    %v1748 = vsub.f32 %v1553, %v1747
    %1749 = vmatmul.f32.gmra.mxu0 %v1748
    %v1750 = vpop.f32.mrf.mxu0
    %v1751 = vadd.f32 %v1697, %v1750
    %1752 = vdwg.mxu0
    %v1753 = vand.u32 %v83, 4294901760
    %1754 = vmatpush.msra.mxu0 %v1753
    %v1755 = vand.u32 %v81, 4294901760
    %1756 = vmatpush.msra.mxu0 %v1755
    %v1757 = vand.u32 %v79, 4294901760
    %1758 = vmatpush.msra.mxu0 %v1757
    %v1759 = vand.u32 %v77, 4294901760
    %1760 = vmatpush.msra.mxu0 %v1759
    %v1761 = vand.u32 %v75, 4294901760
    %1762 = vmatpush.msra.mxu0 %v1761
    %v1763 = vand.u32 %v73, 4294901760
    %1764 = vmatpush.msra.mxu0 %v1763
    %v1765 = vand.u32 %v71, 4294901760
    %1766 = vmatpush.msra.mxu0 %v1765
    %v1767 = vand.u32 %v69, 4294901760
    %1768 = vmatpush.msra.mxu0 %v1767
    %v1769 = vand.u32 %v67, 4294901760
    %1770 = vmatpush.msra.mxu0 %v1769
    %v1771 = vand.u32 %v65, 4294901760
    %1772 = vmatpush.msra.mxu0 %v1771
    %v1773 = vand.u32 %v63, 4294901760
    %1774 = vmatpush.msra.mxu0 %v1773
    %v1775 = vand.u32 %v61, 4294901760
    %1776 = vmatpush.msra.mxu0 %v1775
    %v1777 = vand.u32 %v59, 4294901760
    %1778 = vmatpush.msra.mxu0 %v1777
    %v1779 = vand.u32 %v57, 4294901760
    %1780 = vmatpush.msra.mxu0 %v1779
    %v1781 = vand.u32 %v55, 4294901760
    %1782 = vmatpush.msra.mxu0 %v1781
    %v1783 = vand.u32 %v53, 4294901760
    %1784 = vmatpush.msra.mxu0 %v1783
    %v1785 = vand.u32 %v1553, 4294901760
    %v1786 = vsub.f32 %v1553, %v1785
    %v1787 = vand.u32 %v1786, 4294901760
    %1788 = vmatmul.f32.gmra.mxu0 %v1787
    %v1789 = vpop.f32.mrf.mxu0
    %v1790 = vadd.f32 %v1751, %v1789
    %1791 = vdwg.mxu0
    %v1792 = vand.u32 %v83, 4294901760
    %v1793 = vsub.f32 %v83, %v1792
    %v1794 = vand.u32 %v1793, 4294901760
    %1795 = vmatpush.msra.mxu0 %v1794
    %v1796 = vand.u32 %v81, 4294901760
    %v1797 = vsub.f32 %v81, %v1796
    %v1798 = vand.u32 %v1797, 4294901760
    %1799 = vmatpush.msra.mxu0 %v1798
    %v1800 = vand.u32 %v79, 4294901760
    %v1801 = vsub.f32 %v79, %v1800
    %v1802 = vand.u32 %v1801, 4294901760
    %1803 = vmatpush.msra.mxu0 %v1802
    %v1804 = vand.u32 %v77, 4294901760
    %v1805 = vsub.f32 %v77, %v1804
    %v1806 = vand.u32 %v1805, 4294901760
    %1807 = vmatpush.msra.mxu0 %v1806
    %v1808 = vand.u32 %v75, 4294901760
    %v1809 = vsub.f32 %v75, %v1808
    %v1810 = vand.u32 %v1809, 4294901760
    %1811 = vmatpush.msra.mxu0 %v1810
    %v1812 = vand.u32 %v73, 4294901760
    %v1813 = vsub.f32 %v73, %v1812
    %v1814 = vand.u32 %v1813, 4294901760
    %1815 = vmatpush.msra.mxu0 %v1814
    %v1816 = vand.u32 %v71, 4294901760
    %v1817 = vsub.f32 %v71, %v1816
    %v1818 = vand.u32 %v1817, 4294901760
    %1819 = vmatpush.msra.mxu0 %v1818
    %v1820 = vand.u32 %v69, 4294901760
    %v1821 = vsub.f32 %v69, %v1820
    %v1822 = vand.u32 %v1821, 4294901760
    %1823 = vmatpush.msra.mxu0 %v1822
    %v1824 = vand.u32 %v67, 4294901760
    %v1825 = vsub.f32 %v67, %v1824
    %v1826 = vand.u32 %v1825, 4294901760
    %1827 = vmatpush.msra.mxu0 %v1826
    %v1828 = vand.u32 %v65, 4294901760
    %v1829 = vsub.f32 %v65, %v1828
    %v1830 = vand.u32 %v1829, 4294901760
    %1831 = vmatpush.msra.mxu0 %v1830
    %v1832 = vand.u32 %v63, 4294901760
    %v1833 = vsub.f32 %v63, %v1832
    %v1834 = vand.u32 %v1833, 4294901760
    %1835 = vmatpush.msra.mxu0 %v1834
    %v1836 = vand.u32 %v61, 4294901760
    %v1837 = vsub.f32 %v61, %v1836
    %v1838 = vand.u32 %v1837, 4294901760
    %1839 = vmatpush.msra.mxu0 %v1838
    %v1840 = vand.u32 %v59, 4294901760
    %v1841 = vsub.f32 %v59, %v1840
    %v1842 = vand.u32 %v1841, 4294901760
    %1843 = vmatpush.msra.mxu0 %v1842
    %v1844 = vand.u32 %v57, 4294901760
    %v1845 = vsub.f32 %v57, %v1844
    %v1846 = vand.u32 %v1845, 4294901760
    %1847 = vmatpush.msra.mxu0 %v1846
    %v1848 = vand.u32 %v55, 4294901760
    %v1849 = vsub.f32 %v55, %v1848
    %v1850 = vand.u32 %v1849, 4294901760
    %1851 = vmatpush.msra.mxu0 %v1850
    %v1852 = vand.u32 %v53, 4294901760
    %v1853 = vsub.f32 %v53, %v1852
    %v1854 = vand.u32 %v1853, 4294901760
    %1855 = vmatpush.msra.mxu0 %v1854
    %v1856 = vand.u32 %v1553, 4294901760
    %1857 = vmatmul.f32.gmra.mxu0 %v1856
    %v1858 = vpop.f32.mrf.mxu0
    %v1859 = vadd.f32 %v1790, %v1858
    %1860 = vdwg.mxu0
    %v1861 = vand.u32 %v83, 4294901760
    %1862 = vmatpush.msra.mxu0 %v1861
    %v1863 = vand.u32 %v81, 4294901760
    %1864 = vmatpush.msra.mxu0 %v1863
    %v1865 = vand.u32 %v79, 4294901760
    %1866 = vmatpush.msra.mxu0 %v1865
    %v1867 = vand.u32 %v77, 4294901760
    %1868 = vmatpush.msra.mxu0 %v1867
    %v1869 = vand.u32 %v75, 4294901760
    %1870 = vmatpush.msra.mxu0 %v1869
    %v1871 = vand.u32 %v73, 4294901760
    %1872 = vmatpush.msra.mxu0 %v1871
    %v1873 = vand.u32 %v71, 4294901760
    %1874 = vmatpush.msra.mxu0 %v1873
    %v1875 = vand.u32 %v69, 4294901760
    %1876 = vmatpush.msra.mxu0 %v1875
    %v1877 = vand.u32 %v67, 4294901760
    %1878 = vmatpush.msra.mxu0 %v1877
    %v1879 = vand.u32 %v65, 4294901760
    %1880 = vmatpush.msra.mxu0 %v1879
    %v1881 = vand.u32 %v63, 4294901760
    %1882 = vmatpush.msra.mxu0 %v1881
    %v1883 = vand.u32 %v61, 4294901760
    %1884 = vmatpush.msra.mxu0 %v1883
    %v1885 = vand.u32 %v59, 4294901760
    %1886 = vmatpush.msra.mxu0 %v1885
    %v1887 = vand.u32 %v57, 4294901760
    %1888 = vmatpush.msra.mxu0 %v1887
    %v1889 = vand.u32 %v55, 4294901760
    %1890 = vmatpush.msra.mxu0 %v1889
    %v1891 = vand.u32 %v53, 4294901760
    %1892 = vmatpush.msra.mxu0 %v1891
    %v1893 = vand.u32 %v1553, 4294901760
    %1894 = vmatmul.f32.gmra.mxu0 %v1893
    %v1895 = vpop.f32.mrf.mxu0
    %v1896 = vadd.f32 %v1859, %v1895
    %1897 = vdwg.mxu0
    %v1898 = vand.u32 %v115, 4294901760
    %1899 = vmatpush.msra.mxu0 %v1898
    %v1900 = vand.u32 %v113, 4294901760
    %1901 = vmatpush.msra.mxu0 %v1900
    %v1902 = vand.u32 %v111, 4294901760
    %1903 = vmatpush.msra.mxu0 %v1902
    %v1904 = vand.u32 %v109, 4294901760
    %1905 = vmatpush.msra.mxu0 %v1904
    %v1906 = vand.u32 %v107, 4294901760
    %1907 = vmatpush.msra.mxu0 %v1906
    %v1908 = vand.u32 %v105, 4294901760
    %1909 = vmatpush.msra.mxu0 %v1908
    %v1910 = vand.u32 %v103, 4294901760
    %1911 = vmatpush.msra.mxu0 %v1910
    %v1912 = vand.u32 %v101, 4294901760
    %1913 = vmatpush.msra.mxu0 %v1912
    %v1914 = vand.u32 %v99, 4294901760
    %1915 = vmatpush.msra.mxu0 %v1914
    %v1916 = vand.u32 %v97, 4294901760
    %1917 = vmatpush.msra.mxu0 %v1916
    %v1918 = vand.u32 %v95, 4294901760
    %1919 = vmatpush.msra.mxu0 %v1918
    %v1920 = vand.u32 %v93, 4294901760
    %1921 = vmatpush.msra.mxu0 %v1920
    %v1922 = vand.u32 %v91, 4294901760
    %1923 = vmatpush.msra.mxu0 %v1922
    %v1924 = vand.u32 %v89, 4294901760
    %1925 = vmatpush.msra.mxu0 %v1924
    %v1926 = vand.u32 %v87, 4294901760
    %1927 = vmatpush.msra.mxu0 %v1926
    %v1928 = vand.u32 %v85, 4294901760
    %1929 = vmatpush.msra.mxu0 %v1928
    %v1930 = vand.u32 %v1554, 4294901760
    %v1931 = vsub.f32 %v1554, %v1930
    %v1932 = vand.u32 %v1931, 4294901760
    %v1933 = vsub.f32 %v1931, %v1932
    %v1934 = vand.u32 %v1933, 4294901760
    %1935 = vmatmul.f32.gmra.mxu0 %v1934
    %v1936 = vpop.f32.mrf.mxu0
    %v1937 = vadd.f32 %v1896, %v1936
    %1938 = vdwg.mxu0
    %v1939 = vand.u32 %v115, 4294901760
    %v1940 = vsub.f32 %v115, %v1939
    %v1941 = vand.u32 %v1940, 4294901760
    %v1942 = vsub.f32 %v1940, %v1941
    %v1943 = vand.u32 %v1942, 4294901760
    %1944 = vmatpush.msra.mxu0 %v1943
    %v1945 = vand.u32 %v113, 4294901760
    %v1946 = vsub.f32 %v113, %v1945
    %v1947 = vand.u32 %v1946, 4294901760
    %v1948 = vsub.f32 %v1946, %v1947
    %v1949 = vand.u32 %v1948, 4294901760
    %1950 = vmatpush.msra.mxu0 %v1949
    %v1951 = vand.u32 %v111, 4294901760
    %v1952 = vsub.f32 %v111, %v1951
    %v1953 = vand.u32 %v1952, 4294901760
    %v1954 = vsub.f32 %v1952, %v1953
    %v1955 = vand.u32 %v1954, 4294901760
    %1956 = vmatpush.msra.mxu0 %v1955
    %v1957 = vand.u32 %v109, 4294901760
    %v1958 = vsub.f32 %v109, %v1957
    %v1959 = vand.u32 %v1958, 4294901760
    %v1960 = vsub.f32 %v1958, %v1959
    %v1961 = vand.u32 %v1960, 4294901760
    %1962 = vmatpush.msra.mxu0 %v1961
    %v1963 = vand.u32 %v107, 4294901760
    %v1964 = vsub.f32 %v107, %v1963
    %v1965 = vand.u32 %v1964, 4294901760
    %v1966 = vsub.f32 %v1964, %v1965
    %v1967 = vand.u32 %v1966, 4294901760
    %1968 = vmatpush.msra.mxu0 %v1967
    %v1969 = vand.u32 %v105, 4294901760
    %v1970 = vsub.f32 %v105, %v1969
    %v1971 = vand.u32 %v1970, 4294901760
    %v1972 = vsub.f32 %v1970, %v1971
    %v1973 = vand.u32 %v1972, 4294901760
    %1974 = vmatpush.msra.mxu0 %v1973
    %v1975 = vand.u32 %v103, 4294901760
    %v1976 = vsub.f32 %v103, %v1975
    %v1977 = vand.u32 %v1976, 4294901760
    %v1978 = vsub.f32 %v1976, %v1977
    %v1979 = vand.u32 %v1978, 4294901760
    %1980 = vmatpush.msra.mxu0 %v1979
    %v1981 = vand.u32 %v101, 4294901760
    %v1982 = vsub.f32 %v101, %v1981
    %v1983 = vand.u32 %v1982, 4294901760
    %v1984 = vsub.f32 %v1982, %v1983
    %v1985 = vand.u32 %v1984, 4294901760
    %1986 = vmatpush.msra.mxu0 %v1985
    %v1987 = vand.u32 %v99, 4294901760
    %v1988 = vsub.f32 %v99, %v1987
    %v1989 = vand.u32 %v1988, 4294901760
    %v1990 = vsub.f32 %v1988, %v1989
    %v1991 = vand.u32 %v1990, 4294901760
    %1992 = vmatpush.msra.mxu0 %v1991
    %v1993 = vand.u32 %v97, 4294901760
    %v1994 = vsub.f32 %v97, %v1993
    %v1995 = vand.u32 %v1994, 4294901760
    %v1996 = vsub.f32 %v1994, %v1995
    %v1997 = vand.u32 %v1996, 4294901760
    %1998 = vmatpush.msra.mxu0 %v1997
    %v1999 = vand.u32 %v95, 4294901760
    %v2000 = vsub.f32 %v95, %v1999
    %v2001 = vand.u32 %v2000, 4294901760
    %v2002 = vsub.f32 %v2000, %v2001
    %v2003 = vand.u32 %v2002, 4294901760
    %2004 = vmatpush.msra.mxu0 %v2003
    %v2005 = vand.u32 %v93, 4294901760
    %v2006 = vsub.f32 %v93, %v2005
    %v2007 = vand.u32 %v2006, 4294901760
    %v2008 = vsub.f32 %v2006, %v2007
    %v2009 = vand.u32 %v2008, 4294901760
    %2010 = vmatpush.msra.mxu0 %v2009
    %v2011 = vand.u32 %v91, 4294901760
    %v2012 = vsub.f32 %v91, %v2011
    %v2013 = vand.u32 %v2012, 4294901760
    %v2014 = vsub.f32 %v2012, %v2013
    %v2015 = vand.u32 %v2014, 4294901760
    %2016 = vmatpush.msra.mxu0 %v2015
    %v2017 = vand.u32 %v89, 4294901760
    %v2018 = vsub.f32 %v89, %v2017
    %v2019 = vand.u32 %v2018, 4294901760
    %v2020 = vsub.f32 %v2018, %v2019
    %v2021 = vand.u32 %v2020, 4294901760
    %2022 = vmatpush.msra.mxu0 %v2021
    %v2023 = vand.u32 %v87, 4294901760
    %v2024 = vsub.f32 %v87, %v2023
    %v2025 = vand.u32 %v2024, 4294901760
    %v2026 = vsub.f32 %v2024, %v2025
    %v2027 = vand.u32 %v2026, 4294901760
    %2028 = vmatpush.msra.mxu0 %v2027
    %v2029 = vand.u32 %v85, 4294901760
    %v2030 = vsub.f32 %v85, %v2029
    %v2031 = vand.u32 %v2030, 4294901760
    %v2032 = vsub.f32 %v2030, %v2031
    %v2033 = vand.u32 %v2032, 4294901760
    %2034 = vmatpush.msra.mxu0 %v2033
    %v2035 = vand.u32 %v1554, 4294901760
    %2036 = vmatmul.f32.gmra.mxu0 %v2035
    %v2037 = vpop.f32.mrf.mxu0
    %v2038 = vadd.f32 %v1937, %v2037
    %2039 = vdwg.mxu0
    %v2040 = vand.u32 %v115, 4294901760
    %v2041 = vsub.f32 %v115, %v2040
    %2042 = vmatpush.msra.mxu0 %v2041
    %v2043 = vand.u32 %v113, 4294901760
    %v2044 = vsub.f32 %v113, %v2043
    %2045 = vmatpush.msra.mxu0 %v2044
    %v2046 = vand.u32 %v111, 4294901760
    %v2047 = vsub.f32 %v111, %v2046
    %2048 = vmatpush.msra.mxu0 %v2047
    %v2049 = vand.u32 %v109, 4294901760
    %v2050 = vsub.f32 %v109, %v2049
    %2051 = vmatpush.msra.mxu0 %v2050
    %v2052 = vand.u32 %v107, 4294901760
    %v2053 = vsub.f32 %v107, %v2052
    %2054 = vmatpush.msra.mxu0 %v2053
    %v2055 = vand.u32 %v105, 4294901760
    %v2056 = vsub.f32 %v105, %v2055
    %2057 = vmatpush.msra.mxu0 %v2056
    %v2058 = vand.u32 %v103, 4294901760
    %v2059 = vsub.f32 %v103, %v2058
    %2060 = vmatpush.msra.mxu0 %v2059
    %v2061 = vand.u32 %v101, 4294901760
    %v2062 = vsub.f32 %v101, %v2061
    %2063 = vmatpush.msra.mxu0 %v2062
    %v2064 = vand.u32 %v99, 4294901760
    %v2065 = vsub.f32 %v99, %v2064
    %2066 = vmatpush.msra.mxu0 %v2065
    %v2067 = vand.u32 %v97, 4294901760
    %v2068 = vsub.f32 %v97, %v2067
    %2069 = vmatpush.msra.mxu0 %v2068
    %v2070 = vand.u32 %v95, 4294901760
    %v2071 = vsub.f32 %v95, %v2070
    %2072 = vmatpush.msra.mxu0 %v2071
    %v2073 = vand.u32 %v93, 4294901760
    %v2074 = vsub.f32 %v93, %v2073
    %2075 = vmatpush.msra.mxu0 %v2074
    %v2076 = vand.u32 %v91, 4294901760
    %v2077 = vsub.f32 %v91, %v2076
    %2078 = vmatpush.msra.mxu0 %v2077
    %v2079 = vand.u32 %v89, 4294901760
    %v2080 = vsub.f32 %v89, %v2079
    %2081 = vmatpush.msra.mxu0 %v2080
    %v2082 = vand.u32 %v87, 4294901760
    %v2083 = vsub.f32 %v87, %v2082
    %2084 = vmatpush.msra.mxu0 %v2083
    %v2085 = vand.u32 %v85, 4294901760
    %v2086 = vsub.f32 %v85, %v2085
    %2087 = vmatpush.msra.mxu0 %v2086
    %v2088 = vand.u32 %v1554, 4294901760
    %v2089 = vsub.f32 %v1554, %v2088
    %2090 = vmatmul.f32.gmra.mxu0 %v2089
    %v2091 = vpop.f32.mrf.mxu0
    %v2092 = vadd.f32 %v2038, %v2091
    %2093 = vdwg.mxu0
    %v2094 = vand.u32 %v115, 4294901760
    %2095 = vmatpush.msra.mxu0 %v2094
    %v2096 = vand.u32 %v113, 4294901760
    %2097 = vmatpush.msra.mxu0 %v2096
    %v2098 = vand.u32 %v111, 4294901760
    %2099 = vmatpush.msra.mxu0 %v2098
    %v2100 = vand.u32 %v109, 4294901760
    %2101 = vmatpush.msra.mxu0 %v2100
    %v2102 = vand.u32 %v107, 4294901760
    %2103 = vmatpush.msra.mxu0 %v2102
    %v2104 = vand.u32 %v105, 4294901760
    %2105 = vmatpush.msra.mxu0 %v2104
    %v2106 = vand.u32 %v103, 4294901760
    %2107 = vmatpush.msra.mxu0 %v2106
    %v2108 = vand.u32 %v101, 4294901760
    %2109 = vmatpush.msra.mxu0 %v2108
    %v2110 = vand.u32 %v99, 4294901760
    %2111 = vmatpush.msra.mxu0 %v2110
    %v2112 = vand.u32 %v97, 4294901760
    %2113 = vmatpush.msra.mxu0 %v2112
    %v2114 = vand.u32 %v95, 4294901760
    %2115 = vmatpush.msra.mxu0 %v2114
    %v2116 = vand.u32 %v93, 4294901760
    %2117 = vmatpush.msra.mxu0 %v2116
    %v2118 = vand.u32 %v91, 4294901760
    %2119 = vmatpush.msra.mxu0 %v2118
    %v2120 = vand.u32 %v89, 4294901760
    %2121 = vmatpush.msra.mxu0 %v2120
    %v2122 = vand.u32 %v87, 4294901760
    %2123 = vmatpush.msra.mxu0 %v2122
    %v2124 = vand.u32 %v85, 4294901760
    %2125 = vmatpush.msra.mxu0 %v2124
    %v2126 = vand.u32 %v1554, 4294901760
    %v2127 = vsub.f32 %v1554, %v2126
    %v2128 = vand.u32 %v2127, 4294901760
    %2129 = vmatmul.f32.gmra.mxu0 %v2128
    %v2130 = vpop.f32.mrf.mxu0
    %v2131 = vadd.f32 %v2092, %v2130
    %2132 = vdwg.mxu0
    %v2133 = vand.u32 %v115, 4294901760
    %v2134 = vsub.f32 %v115, %v2133
    %v2135 = vand.u32 %v2134, 4294901760
    %2136 = vmatpush.msra.mxu0 %v2135
    %v2137 = vand.u32 %v113, 4294901760
    %v2138 = vsub.f32 %v113, %v2137
    %v2139 = vand.u32 %v2138, 4294901760
    %2140 = vmatpush.msra.mxu0 %v2139
    %v2141 = vand.u32 %v111, 4294901760
    %v2142 = vsub.f32 %v111, %v2141
    %v2143 = vand.u32 %v2142, 4294901760
    %2144 = vmatpush.msra.mxu0 %v2143
    %v2145 = vand.u32 %v109, 4294901760
    %v2146 = vsub.f32 %v109, %v2145
    %v2147 = vand.u32 %v2146, 4294901760
    %2148 = vmatpush.msra.mxu0 %v2147
    %v2149 = vand.u32 %v107, 4294901760
    %v2150 = vsub.f32 %v107, %v2149
    %v2151 = vand.u32 %v2150, 4294901760
    %2152 = vmatpush.msra.mxu0 %v2151
    %v2153 = vand.u32 %v105, 4294901760
    %v2154 = vsub.f32 %v105, %v2153
    %v2155 = vand.u32 %v2154, 4294901760
    %2156 = vmatpush.msra.mxu0 %v2155
    %v2157 = vand.u32 %v103, 4294901760
    %v2158 = vsub.f32 %v103, %v2157
    %v2159 = vand.u32 %v2158, 4294901760
    %2160 = vmatpush.msra.mxu0 %v2159
    %v2161 = vand.u32 %v101, 4294901760
    %v2162 = vsub.f32 %v101, %v2161
    %v2163 = vand.u32 %v2162, 4294901760
    %2164 = vmatpush.msra.mxu0 %v2163
    %v2165 = vand.u32 %v99, 4294901760
    %v2166 = vsub.f32 %v99, %v2165
    %v2167 = vand.u32 %v2166, 4294901760
    %2168 = vmatpush.msra.mxu0 %v2167
    %v2169 = vand.u32 %v97, 4294901760
    %v2170 = vsub.f32 %v97, %v2169
    %v2171 = vand.u32 %v2170, 4294901760
    %2172 = vmatpush.msra.mxu0 %v2171
    %v2173 = vand.u32 %v95, 4294901760
    %v2174 = vsub.f32 %v95, %v2173
    %v2175 = vand.u32 %v2174, 4294901760
    %2176 = vmatpush.msra.mxu0 %v2175
    %v2177 = vand.u32 %v93, 4294901760
    %v2178 = vsub.f32 %v93, %v2177
    %v2179 = vand.u32 %v2178, 4294901760
    %2180 = vmatpush.msra.mxu0 %v2179
    %v2181 = vand.u32 %v91, 4294901760
    %v2182 = vsub.f32 %v91, %v2181
    %v2183 = vand.u32 %v2182, 4294901760
    %2184 = vmatpush.msra.mxu0 %v2183
    %v2185 = vand.u32 %v89, 4294901760
    %v2186 = vsub.f32 %v89, %v2185
    %v2187 = vand.u32 %v2186, 4294901760
    %2188 = vmatpush.msra.mxu0 %v2187
    %v2189 = vand.u32 %v87, 4294901760
    %v2190 = vsub.f32 %v87, %v2189
    %v2191 = vand.u32 %v2190, 4294901760
    %2192 = vmatpush.msra.mxu0 %v2191
    %v2193 = vand.u32 %v85, 4294901760
    %v2194 = vsub.f32 %v85, %v2193
    %v2195 = vand.u32 %v2194, 4294901760
    %2196 = vmatpush.msra.mxu0 %v2195
    %v2197 = vand.u32 %v1554, 4294901760
    %2198 = vmatmul.f32.gmra.mxu0 %v2197
    %v2199 = vpop.f32.mrf.mxu0
    %v2200 = vadd.f32 %v2131, %v2199
    %2201 = vdwg.mxu0
    %v2202 = vand.u32 %v115, 4294901760
    %2203 = vmatpush.msra.mxu0 %v2202
    %v2204 = vand.u32 %v113, 4294901760
    %2205 = vmatpush.msra.mxu0 %v2204
    %v2206 = vand.u32 %v111, 4294901760
    %2207 = vmatpush.msra.mxu0 %v2206
    %v2208 = vand.u32 %v109, 4294901760
    %2209 = vmatpush.msra.mxu0 %v2208
    %v2210 = vand.u32 %v107, 4294901760
    %2211 = vmatpush.msra.mxu0 %v2210
    %v2212 = vand.u32 %v105, 4294901760
    %2213 = vmatpush.msra.mxu0 %v2212
    %v2214 = vand.u32 %v103, 4294901760
    %2215 = vmatpush.msra.mxu0 %v2214
    %v2216 = vand.u32 %v101, 4294901760
    %2217 = vmatpush.msra.mxu0 %v2216
    %v2218 = vand.u32 %v99, 4294901760
    %2219 = vmatpush.msra.mxu0 %v2218
    %v2220 = vand.u32 %v97, 4294901760
    %2221 = vmatpush.msra.mxu0 %v2220
    %v2222 = vand.u32 %v95, 4294901760
    %2223 = vmatpush.msra.mxu0 %v2222
    %v2224 = vand.u32 %v93, 4294901760
    %2225 = vmatpush.msra.mxu0 %v2224
    %v2226 = vand.u32 %v91, 4294901760
    %2227 = vmatpush.msra.mxu0 %v2226
    %v2228 = vand.u32 %v89, 4294901760
    %2229 = vmatpush.msra.mxu0 %v2228
    %v2230 = vand.u32 %v87, 4294901760
    %2231 = vmatpush.msra.mxu0 %v2230
    %v2232 = vand.u32 %v85, 4294901760
    %2233 = vmatpush.msra.mxu0 %v2232
    %v2234 = vand.u32 %v1554, 4294901760
    %2235 = vmatmul.f32.gmra.mxu0 %v2234
    %v2236 = vpop.f32.mrf.mxu0
    %v2237 = vadd.f32 %v2200, %v2236
    %2238 = vdwg.mxu0
    %v2239 = vand.u32 %v84, 4294901760
    %2240 = vmatpush.msra.mxu0 %v2239
    %v2241 = vand.u32 %v82, 4294901760
    %2242 = vmatpush.msra.mxu0 %v2241
    %v2243 = vand.u32 %v80, 4294901760
    %2244 = vmatpush.msra.mxu0 %v2243
    %v2245 = vand.u32 %v78, 4294901760
    %2246 = vmatpush.msra.mxu0 %v2245
    %v2247 = vand.u32 %v76, 4294901760
    %2248 = vmatpush.msra.mxu0 %v2247
    %v2249 = vand.u32 %v74, 4294901760
    %2250 = vmatpush.msra.mxu0 %v2249
    %v2251 = vand.u32 %v72, 4294901760
    %2252 = vmatpush.msra.mxu0 %v2251
    %v2253 = vand.u32 %v70, 4294901760
    %2254 = vmatpush.msra.mxu0 %v2253
    %v2255 = vand.u32 %v68, 4294901760
    %2256 = vmatpush.msra.mxu0 %v2255
    %v2257 = vand.u32 %v66, 4294901760
    %2258 = vmatpush.msra.mxu0 %v2257
    %v2259 = vand.u32 %v64, 4294901760
    %2260 = vmatpush.msra.mxu0 %v2259
    %v2261 = vand.u32 %v62, 4294901760
    %2262 = vmatpush.msra.mxu0 %v2261
    %v2263 = vand.u32 %v60, 4294901760
    %2264 = vmatpush.msra.mxu0 %v2263
    %v2265 = vand.u32 %v58, 4294901760
    %2266 = vmatpush.msra.mxu0 %v2265
    %v2267 = vand.u32 %v56, 4294901760
    %2268 = vmatpush.msra.mxu0 %v2267
    %v2269 = vand.u32 %v54, 4294901760
    %2270 = vmatpush.msra.mxu0 %v2269
    %v2271 = vand.u32 %v1553, 4294901760
    %v2272 = vsub.f32 %v1553, %v2271
    %v2273 = vand.u32 %v2272, 4294901760
    %v2274 = vsub.f32 %v2272, %v2273
    %v2275 = vand.u32 %v2274, 4294901760
    %2276 = vmatmul.f32.gmra.mxu0 %v2275
    %v2277 = vpop.f32.mrf.mxu0
    %v2278 = vadd.f32 %v1549, %v2277
    %2279 = vdwg.mxu0
    %v2280 = vand.u32 %v84, 4294901760
    %v2281 = vsub.f32 %v84, %v2280
    %v2282 = vand.u32 %v2281, 4294901760
    %v2283 = vsub.f32 %v2281, %v2282
    %v2284 = vand.u32 %v2283, 4294901760
    %2285 = vmatpush.msra.mxu0 %v2284
    %v2286 = vand.u32 %v82, 4294901760
    %v2287 = vsub.f32 %v82, %v2286
    %v2288 = vand.u32 %v2287, 4294901760
    %v2289 = vsub.f32 %v2287, %v2288
    %v2290 = vand.u32 %v2289, 4294901760
    %2291 = vmatpush.msra.mxu0 %v2290
    %v2292 = vand.u32 %v80, 4294901760
    %v2293 = vsub.f32 %v80, %v2292
    %v2294 = vand.u32 %v2293, 4294901760
    %v2295 = vsub.f32 %v2293, %v2294
    %v2296 = vand.u32 %v2295, 4294901760
    %2297 = vmatpush.msra.mxu0 %v2296
    %v2298 = vand.u32 %v78, 4294901760
    %v2299 = vsub.f32 %v78, %v2298
    %v2300 = vand.u32 %v2299, 4294901760
    %v2301 = vsub.f32 %v2299, %v2300
    %v2302 = vand.u32 %v2301, 4294901760
    %2303 = vmatpush.msra.mxu0 %v2302
    %v2304 = vand.u32 %v76, 4294901760
    %v2305 = vsub.f32 %v76, %v2304
    %v2306 = vand.u32 %v2305, 4294901760
    %v2307 = vsub.f32 %v2305, %v2306
    %v2308 = vand.u32 %v2307, 4294901760
    %2309 = vmatpush.msra.mxu0 %v2308
    %v2310 = vand.u32 %v74, 4294901760
    %v2311 = vsub.f32 %v74, %v2310
    %v2312 = vand.u32 %v2311, 4294901760
    %v2313 = vsub.f32 %v2311, %v2312
    %v2314 = vand.u32 %v2313, 4294901760
    %2315 = vmatpush.msra.mxu0 %v2314
    %v2316 = vand.u32 %v72, 4294901760
    %v2317 = vsub.f32 %v72, %v2316
    %v2318 = vand.u32 %v2317, 4294901760
    %v2319 = vsub.f32 %v2317, %v2318
    %v2320 = vand.u32 %v2319, 4294901760
    %2321 = vmatpush.msra.mxu0 %v2320
    %v2322 = vand.u32 %v70, 4294901760
    %v2323 = vsub.f32 %v70, %v2322
    %v2324 = vand.u32 %v2323, 4294901760
    %v2325 = vsub.f32 %v2323, %v2324
    %v2326 = vand.u32 %v2325, 4294901760
    %2327 = vmatpush.msra.mxu0 %v2326
    %v2328 = vand.u32 %v68, 4294901760
    %v2329 = vsub.f32 %v68, %v2328
    %v2330 = vand.u32 %v2329, 4294901760
    %v2331 = vsub.f32 %v2329, %v2330
    %v2332 = vand.u32 %v2331, 4294901760
    %2333 = vmatpush.msra.mxu0 %v2332
    %v2334 = vand.u32 %v66, 4294901760
    %v2335 = vsub.f32 %v66, %v2334
    %v2336 = vand.u32 %v2335, 4294901760
    %v2337 = vsub.f32 %v2335, %v2336
    %v2338 = vand.u32 %v2337, 4294901760
    %2339 = vmatpush.msra.mxu0 %v2338
    %v2340 = vand.u32 %v64, 4294901760
    %v2341 = vsub.f32 %v64, %v2340
    %v2342 = vand.u32 %v2341, 4294901760
    %v2343 = vsub.f32 %v2341, %v2342
    %v2344 = vand.u32 %v2343, 4294901760
    %2345 = vmatpush.msra.mxu0 %v2344
    %v2346 = vand.u32 %v62, 4294901760
    %v2347 = vsub.f32 %v62, %v2346
    %v2348 = vand.u32 %v2347, 4294901760
    %v2349 = vsub.f32 %v2347, %v2348
    %v2350 = vand.u32 %v2349, 4294901760
    %2351 = vmatpush.msra.mxu0 %v2350
    %v2352 = vand.u32 %v60, 4294901760
    %v2353 = vsub.f32 %v60, %v2352
    %v2354 = vand.u32 %v2353, 4294901760
    %v2355 = vsub.f32 %v2353, %v2354
    %v2356 = vand.u32 %v2355, 4294901760
    %2357 = vmatpush.msra.mxu0 %v2356
    %v2358 = vand.u32 %v58, 4294901760
    %v2359 = vsub.f32 %v58, %v2358
    %v2360 = vand.u32 %v2359, 4294901760
    %v2361 = vsub.f32 %v2359, %v2360
    %v2362 = vand.u32 %v2361, 4294901760
    %2363 = vmatpush.msra.mxu0 %v2362
    %v2364 = vand.u32 %v56, 4294901760
    %v2365 = vsub.f32 %v56, %v2364
    %v2366 = vand.u32 %v2365, 4294901760
    %v2367 = vsub.f32 %v2365, %v2366
    %v2368 = vand.u32 %v2367, 4294901760
    %2369 = vmatpush.msra.mxu0 %v2368
    %v2370 = vand.u32 %v54, 4294901760
    %v2371 = vsub.f32 %v54, %v2370
    %v2372 = vand.u32 %v2371, 4294901760
    %v2373 = vsub.f32 %v2371, %v2372
    %v2374 = vand.u32 %v2373, 4294901760
    %2375 = vmatpush.msra.mxu0 %v2374
    %v2376 = vand.u32 %v1553, 4294901760
    %2377 = vmatmul.f32.gmra.mxu0 %v2376
    %v2378 = vpop.f32.mrf.mxu0
    %v2379 = vadd.f32 %v2278, %v2378
    %2380 = vdwg.mxu0
    %v2381 = vand.u32 %v84, 4294901760
    %v2382 = vsub.f32 %v84, %v2381
    %2383 = vmatpush.msra.mxu0 %v2382
    %v2384 = vand.u32 %v82, 4294901760
    %v2385 = vsub.f32 %v82, %v2384
    %2386 = vmatpush.msra.mxu0 %v2385
    %v2387 = vand.u32 %v80, 4294901760
    %v2388 = vsub.f32 %v80, %v2387
    %2389 = vmatpush.msra.mxu0 %v2388
    %v2390 = vand.u32 %v78, 4294901760
    %v2391 = vsub.f32 %v78, %v2390
    %2392 = vmatpush.msra.mxu0 %v2391
    %v2393 = vand.u32 %v76, 4294901760
    %v2394 = vsub.f32 %v76, %v2393
    %2395 = vmatpush.msra.mxu0 %v2394
    %v2396 = vand.u32 %v74, 4294901760
    %v2397 = vsub.f32 %v74, %v2396
    %2398 = vmatpush.msra.mxu0 %v2397
    %v2399 = vand.u32 %v72, 4294901760
    %v2400 = vsub.f32 %v72, %v2399
    %2401 = vmatpush.msra.mxu0 %v2400
    %v2402 = vand.u32 %v70, 4294901760
    %v2403 = vsub.f32 %v70, %v2402
    %2404 = vmatpush.msra.mxu0 %v2403
    %v2405 = vand.u32 %v68, 4294901760
    %v2406 = vsub.f32 %v68, %v2405
    %2407 = vmatpush.msra.mxu0 %v2406
    %v2408 = vand.u32 %v66, 4294901760
    %v2409 = vsub.f32 %v66, %v2408
    %2410 = vmatpush.msra.mxu0 %v2409
    %v2411 = vand.u32 %v64, 4294901760
    %v2412 = vsub.f32 %v64, %v2411
    %2413 = vmatpush.msra.mxu0 %v2412
    %v2414 = vand.u32 %v62, 4294901760
    %v2415 = vsub.f32 %v62, %v2414
    %2416 = vmatpush.msra.mxu0 %v2415
    %v2417 = vand.u32 %v60, 4294901760
    %v2418 = vsub.f32 %v60, %v2417
    %2419 = vmatpush.msra.mxu0 %v2418
    %v2420 = vand.u32 %v58, 4294901760
    %v2421 = vsub.f32 %v58, %v2420
    %2422 = vmatpush.msra.mxu0 %v2421
    %v2423 = vand.u32 %v56, 4294901760
    %v2424 = vsub.f32 %v56, %v2423
    %2425 = vmatpush.msra.mxu0 %v2424
    %v2426 = vand.u32 %v54, 4294901760
    %v2427 = vsub.f32 %v54, %v2426
    %2428 = vmatpush.msra.mxu0 %v2427
    %v2429 = vand.u32 %v1553, 4294901760
    %v2430 = vsub.f32 %v1553, %v2429
    %2431 = vmatmul.f32.gmra.mxu0 %v2430
    %v2432 = vpop.f32.mrf.mxu0
    %v2433 = vadd.f32 %v2379, %v2432
    %2434 = vdwg.mxu0
    %v2435 = vand.u32 %v84, 4294901760
    %2436 = vmatpush.msra.mxu0 %v2435
    %v2437 = vand.u32 %v82, 4294901760
    %2438 = vmatpush.msra.mxu0 %v2437
    %v2439 = vand.u32 %v80, 4294901760
    %2440 = vmatpush.msra.mxu0 %v2439
    %v2441 = vand.u32 %v78, 4294901760
    %2442 = vmatpush.msra.mxu0 %v2441
    %v2443 = vand.u32 %v76, 4294901760
    %2444 = vmatpush.msra.mxu0 %v2443
    %v2445 = vand.u32 %v74, 4294901760
    %2446 = vmatpush.msra.mxu0 %v2445
    %v2447 = vand.u32 %v72, 4294901760
    %2448 = vmatpush.msra.mxu0 %v2447
    %v2449 = vand.u32 %v70, 4294901760
    %2450 = vmatpush.msra.mxu0 %v2449
    %v2451 = vand.u32 %v68, 4294901760
    %2452 = vmatpush.msra.mxu0 %v2451
    %v2453 = vand.u32 %v66, 4294901760
    %2454 = vmatpush.msra.mxu0 %v2453
    %v2455 = vand.u32 %v64, 4294901760
    %2456 = vmatpush.msra.mxu0 %v2455
    %v2457 = vand.u32 %v62, 4294901760
    %2458 = vmatpush.msra.mxu0 %v2457
    %v2459 = vand.u32 %v60, 4294901760
    %2460 = vmatpush.msra.mxu0 %v2459
    %v2461 = vand.u32 %v58, 4294901760
    %2462 = vmatpush.msra.mxu0 %v2461
    %v2463 = vand.u32 %v56, 4294901760
    %2464 = vmatpush.msra.mxu0 %v2463
    %v2465 = vand.u32 %v54, 4294901760
    %2466 = vmatpush.msra.mxu0 %v2465
    %v2467 = vand.u32 %v1553, 4294901760
    %v2468 = vsub.f32 %v1553, %v2467
    %v2469 = vand.u32 %v2468, 4294901760
    %2470 = vmatmul.f32.gmra.mxu0 %v2469
    %v2471 = vpop.f32.mrf.mxu0
    %v2472 = vadd.f32 %v2433, %v2471
    %2473 = vdwg.mxu0
    %v2474 = vand.u32 %v84, 4294901760
    %v2475 = vsub.f32 %v84, %v2474
    %v2476 = vand.u32 %v2475, 4294901760
    %2477 = vmatpush.msra.mxu0 %v2476
    %v2478 = vand.u32 %v82, 4294901760
    %v2479 = vsub.f32 %v82, %v2478
    %v2480 = vand.u32 %v2479, 4294901760
    %2481 = vmatpush.msra.mxu0 %v2480
    %v2482 = vand.u32 %v80, 4294901760
    %v2483 = vsub.f32 %v80, %v2482
    %v2484 = vand.u32 %v2483, 4294901760
    %2485 = vmatpush.msra.mxu0 %v2484
    %v2486 = vand.u32 %v78, 4294901760
    %v2487 = vsub.f32 %v78, %v2486
    %v2488 = vand.u32 %v2487, 4294901760
    %2489 = vmatpush.msra.mxu0 %v2488
    %v2490 = vand.u32 %v76, 4294901760
    %v2491 = vsub.f32 %v76, %v2490
    %v2492 = vand.u32 %v2491, 4294901760
    %2493 = vmatpush.msra.mxu0 %v2492
    %v2494 = vand.u32 %v74, 4294901760
    %v2495 = vsub.f32 %v74, %v2494
    %v2496 = vand.u32 %v2495, 4294901760
    %2497 = vmatpush.msra.mxu0 %v2496
    %v2498 = vand.u32 %v72, 4294901760
    %v2499 = vsub.f32 %v72, %v2498
    %v2500 = vand.u32 %v2499, 4294901760
    %2501 = vmatpush.msra.mxu0 %v2500
    %v2502 = vand.u32 %v70, 4294901760
    %v2503 = vsub.f32 %v70, %v2502
    %v2504 = vand.u32 %v2503, 4294901760
    %2505 = vmatpush.msra.mxu0 %v2504
    %v2506 = vand.u32 %v68, 4294901760
    %v2507 = vsub.f32 %v68, %v2506
    %v2508 = vand.u32 %v2507, 4294901760
    %2509 = vmatpush.msra.mxu0 %v2508
    %v2510 = vand.u32 %v66, 4294901760
    %v2511 = vsub.f32 %v66, %v2510
    %v2512 = vand.u32 %v2511, 4294901760
    %2513 = vmatpush.msra.mxu0 %v2512
    %v2514 = vand.u32 %v64, 4294901760
    %v2515 = vsub.f32 %v64, %v2514
    %v2516 = vand.u32 %v2515, 4294901760
    %2517 = vmatpush.msra.mxu0 %v2516
    %v2518 = vand.u32 %v62, 4294901760
    %v2519 = vsub.f32 %v62, %v2518
    %v2520 = vand.u32 %v2519, 4294901760
    %2521 = vmatpush.msra.mxu0 %v2520
    %v2522 = vand.u32 %v60, 4294901760
    %v2523 = vsub.f32 %v60, %v2522
    %v2524 = vand.u32 %v2523, 4294901760
    %2525 = vmatpush.msra.mxu0 %v2524
    %v2526 = vand.u32 %v58, 4294901760
    %v2527 = vsub.f32 %v58, %v2526
    %v2528 = vand.u32 %v2527, 4294901760
    %2529 = vmatpush.msra.mxu0 %v2528
    %v2530 = vand.u32 %v56, 4294901760
    %v2531 = vsub.f32 %v56, %v2530
    %v2532 = vand.u32 %v2531, 4294901760
    %2533 = vmatpush.msra.mxu0 %v2532
    %v2534 = vand.u32 %v54, 4294901760
    %v2535 = vsub.f32 %v54, %v2534
    %v2536 = vand.u32 %v2535, 4294901760
    %2537 = vmatpush.msra.mxu0 %v2536
    %v2538 = vand.u32 %v1553, 4294901760
    %2539 = vmatmul.f32.gmra.mxu0 %v2538
    %v2540 = vpop.f32.mrf.mxu0
    %v2541 = vadd.f32 %v2472, %v2540
    %2542 = vdwg.mxu0
    %v2543 = vand.u32 %v84, 4294901760
    %2544 = vmatpush.msra.mxu0 %v2543
    %v2545 = vand.u32 %v82, 4294901760
    %2546 = vmatpush.msra.mxu0 %v2545
    %v2547 = vand.u32 %v80, 4294901760
    %2548 = vmatpush.msra.mxu0 %v2547
    %v2549 = vand.u32 %v78, 4294901760
    %2550 = vmatpush.msra.mxu0 %v2549
    %v2551 = vand.u32 %v76, 4294901760
    %2552 = vmatpush.msra.mxu0 %v2551
    %v2553 = vand.u32 %v74, 4294901760
    %2554 = vmatpush.msra.mxu0 %v2553
    %v2555 = vand.u32 %v72, 4294901760
    %2556 = vmatpush.msra.mxu0 %v2555
    %v2557 = vand.u32 %v70, 4294901760
    %2558 = vmatpush.msra.mxu0 %v2557
    %v2559 = vand.u32 %v68, 4294901760
    %2560 = vmatpush.msra.mxu0 %v2559
    %v2561 = vand.u32 %v66, 4294901760
    %2562 = vmatpush.msra.mxu0 %v2561
    %v2563 = vand.u32 %v64, 4294901760
    %2564 = vmatpush.msra.mxu0 %v2563
    %v2565 = vand.u32 %v62, 4294901760
    %2566 = vmatpush.msra.mxu0 %v2565
    %v2567 = vand.u32 %v60, 4294901760
    %2568 = vmatpush.msra.mxu0 %v2567
    %v2569 = vand.u32 %v58, 4294901760
    %2570 = vmatpush.msra.mxu0 %v2569
    %v2571 = vand.u32 %v56, 4294901760
    %2572 = vmatpush.msra.mxu0 %v2571
    %v2573 = vand.u32 %v54, 4294901760
    %2574 = vmatpush.msra.mxu0 %v2573
    %v2575 = vand.u32 %v1553, 4294901760
    %2576 = vmatmul.f32.gmra.mxu0 %v2575
    %v2577 = vpop.f32.mrf.mxu0
    %v2578 = vadd.f32 %v2541, %v2577
    %2579 = vdwg.mxu0
    %v2580 = vand.u32 %v116, 4294901760
    %2581 = vmatpush.msra.mxu0 %v2580
    %v2582 = vand.u32 %v114, 4294901760
    %2583 = vmatpush.msra.mxu0 %v2582
    %v2584 = vand.u32 %v112, 4294901760
    %2585 = vmatpush.msra.mxu0 %v2584
    %v2586 = vand.u32 %v110, 4294901760
    %2587 = vmatpush.msra.mxu0 %v2586
    %v2588 = vand.u32 %v108, 4294901760
    %2589 = vmatpush.msra.mxu0 %v2588
    %v2590 = vand.u32 %v106, 4294901760
    %2591 = vmatpush.msra.mxu0 %v2590
    %v2592 = vand.u32 %v104, 4294901760
    %2593 = vmatpush.msra.mxu0 %v2592
    %v2594 = vand.u32 %v102, 4294901760
    %2595 = vmatpush.msra.mxu0 %v2594
    %v2596 = vand.u32 %v100, 4294901760
    %2597 = vmatpush.msra.mxu0 %v2596
    %v2598 = vand.u32 %v98, 4294901760
    %2599 = vmatpush.msra.mxu0 %v2598
    %v2600 = vand.u32 %v96, 4294901760
    %2601 = vmatpush.msra.mxu0 %v2600
    %v2602 = vand.u32 %v94, 4294901760
    %2603 = vmatpush.msra.mxu0 %v2602
    %v2604 = vand.u32 %v92, 4294901760
    %2605 = vmatpush.msra.mxu0 %v2604
    %v2606 = vand.u32 %v90, 4294901760
    %2607 = vmatpush.msra.mxu0 %v2606
    %v2608 = vand.u32 %v88, 4294901760
    %2609 = vmatpush.msra.mxu0 %v2608
    %v2610 = vand.u32 %v86, 4294901760
    %2611 = vmatpush.msra.mxu0 %v2610
    %v2612 = vand.u32 %v1554, 4294901760
    %v2613 = vsub.f32 %v1554, %v2612
    %v2614 = vand.u32 %v2613, 4294901760
    %v2615 = vsub.f32 %v2613, %v2614
    %v2616 = vand.u32 %v2615, 4294901760
    %2617 = vmatmul.f32.gmra.mxu0 %v2616
    %v2618 = vpop.f32.mrf.mxu0
    %v2619 = vadd.f32 %v2578, %v2618
    %2620 = vdwg.mxu0
    %v2621 = vand.u32 %v116, 4294901760
    %v2622 = vsub.f32 %v116, %v2621
    %v2623 = vand.u32 %v2622, 4294901760
    %v2624 = vsub.f32 %v2622, %v2623
    %v2625 = vand.u32 %v2624, 4294901760
    %2626 = vmatpush.msra.mxu0 %v2625
    %v2627 = vand.u32 %v114, 4294901760
    %v2628 = vsub.f32 %v114, %v2627
    %v2629 = vand.u32 %v2628, 4294901760
    %v2630 = vsub.f32 %v2628, %v2629
    %v2631 = vand.u32 %v2630, 4294901760
    %2632 = vmatpush.msra.mxu0 %v2631
    %v2633 = vand.u32 %v112, 4294901760
    %v2634 = vsub.f32 %v112, %v2633
    %v2635 = vand.u32 %v2634, 4294901760
    %v2636 = vsub.f32 %v2634, %v2635
    %v2637 = vand.u32 %v2636, 4294901760
    %2638 = vmatpush.msra.mxu0 %v2637
    %v2639 = vand.u32 %v110, 4294901760
    %v2640 = vsub.f32 %v110, %v2639
    %v2641 = vand.u32 %v2640, 4294901760
    %v2642 = vsub.f32 %v2640, %v2641
    %v2643 = vand.u32 %v2642, 4294901760
    %2644 = vmatpush.msra.mxu0 %v2643
    %v2645 = vand.u32 %v108, 4294901760
    %v2646 = vsub.f32 %v108, %v2645
    %v2647 = vand.u32 %v2646, 4294901760
    %v2648 = vsub.f32 %v2646, %v2647
    %v2649 = vand.u32 %v2648, 4294901760
    %2650 = vmatpush.msra.mxu0 %v2649
    %v2651 = vand.u32 %v106, 4294901760
    %v2652 = vsub.f32 %v106, %v2651
    %v2653 = vand.u32 %v2652, 4294901760
    %v2654 = vsub.f32 %v2652, %v2653
    %v2655 = vand.u32 %v2654, 4294901760
    %2656 = vmatpush.msra.mxu0 %v2655
    %v2657 = vand.u32 %v104, 4294901760
    %v2658 = vsub.f32 %v104, %v2657
    %v2659 = vand.u32 %v2658, 4294901760
    %v2660 = vsub.f32 %v2658, %v2659
    %v2661 = vand.u32 %v2660, 4294901760
    %2662 = vmatpush.msra.mxu0 %v2661
    %v2663 = vand.u32 %v102, 4294901760
    %v2664 = vsub.f32 %v102, %v2663
    %v2665 = vand.u32 %v2664, 4294901760
    %v2666 = vsub.f32 %v2664, %v2665
    %v2667 = vand.u32 %v2666, 4294901760
    %2668 = vmatpush.msra.mxu0 %v2667
    %v2669 = vand.u32 %v100, 4294901760
    %v2670 = vsub.f32 %v100, %v2669
    %v2671 = vand.u32 %v2670, 4294901760
    %v2672 = vsub.f32 %v2670, %v2671
    %v2673 = vand.u32 %v2672, 4294901760
    %2674 = vmatpush.msra.mxu0 %v2673
    %v2675 = vand.u32 %v98, 4294901760
    %v2676 = vsub.f32 %v98, %v2675
    %v2677 = vand.u32 %v2676, 4294901760
    %v2678 = vsub.f32 %v2676, %v2677
    %v2679 = vand.u32 %v2678, 4294901760
    %2680 = vmatpush.msra.mxu0 %v2679
    %v2681 = vand.u32 %v96, 4294901760
    %v2682 = vsub.f32 %v96, %v2681
    %v2683 = vand.u32 %v2682, 4294901760
    %v2684 = vsub.f32 %v2682, %v2683
    %v2685 = vand.u32 %v2684, 4294901760
    %2686 = vmatpush.msra.mxu0 %v2685
    %v2687 = vand.u32 %v94, 4294901760
    %v2688 = vsub.f32 %v94, %v2687
    %v2689 = vand.u32 %v2688, 4294901760
    %v2690 = vsub.f32 %v2688, %v2689
    %v2691 = vand.u32 %v2690, 4294901760
    %2692 = vmatpush.msra.mxu0 %v2691
    %v2693 = vand.u32 %v92, 4294901760
    %v2694 = vsub.f32 %v92, %v2693
    %v2695 = vand.u32 %v2694, 4294901760
    %v2696 = vsub.f32 %v2694, %v2695
    %v2697 = vand.u32 %v2696, 4294901760
    %2698 = vmatpush.msra.mxu0 %v2697
    %v2699 = vand.u32 %v90, 4294901760
    %v2700 = vsub.f32 %v90, %v2699
    %v2701 = vand.u32 %v2700, 4294901760
    %v2702 = vsub.f32 %v2700, %v2701
    %v2703 = vand.u32 %v2702, 4294901760
    %2704 = vmatpush.msra.mxu0 %v2703
    %v2705 = vand.u32 %v88, 4294901760
    %v2706 = vsub.f32 %v88, %v2705
    %v2707 = vand.u32 %v2706, 4294901760
    %v2708 = vsub.f32 %v2706, %v2707
    %v2709 = vand.u32 %v2708, 4294901760
    %2710 = vmatpush.msra.mxu0 %v2709
    %v2711 = vand.u32 %v86, 4294901760
    %v2712 = vsub.f32 %v86, %v2711
    %v2713 = vand.u32 %v2712, 4294901760
    %v2714 = vsub.f32 %v2712, %v2713
    %v2715 = vand.u32 %v2714, 4294901760
    %2716 = vmatpush.msra.mxu0 %v2715
    %v2717 = vand.u32 %v1554, 4294901760
    %2718 = vmatmul.f32.gmra.mxu0 %v2717
    %v2719 = vpop.f32.mrf.mxu0
    %v2720 = vadd.f32 %v2619, %v2719
    %2721 = vdwg.mxu0
    %v2722 = vand.u32 %v116, 4294901760
    %v2723 = vsub.f32 %v116, %v2722
    %2724 = vmatpush.msra.mxu0 %v2723
    %v2725 = vand.u32 %v114, 4294901760
    %v2726 = vsub.f32 %v114, %v2725
    %2727 = vmatpush.msra.mxu0 %v2726
    %v2728 = vand.u32 %v112, 4294901760
    %v2729 = vsub.f32 %v112, %v2728
    %2730 = vmatpush.msra.mxu0 %v2729
    %v2731 = vand.u32 %v110, 4294901760
    %v2732 = vsub.f32 %v110, %v2731
    %2733 = vmatpush.msra.mxu0 %v2732
    %v2734 = vand.u32 %v108, 4294901760
    %v2735 = vsub.f32 %v108, %v2734
    %2736 = vmatpush.msra.mxu0 %v2735
    %v2737 = vand.u32 %v106, 4294901760
    %v2738 = vsub.f32 %v106, %v2737
    %2739 = vmatpush.msra.mxu0 %v2738
    %v2740 = vand.u32 %v104, 4294901760
    %v2741 = vsub.f32 %v104, %v2740
    %2742 = vmatpush.msra.mxu0 %v2741
    %v2743 = vand.u32 %v102, 4294901760
    %v2744 = vsub.f32 %v102, %v2743
    %2745 = vmatpush.msra.mxu0 %v2744
    %v2746 = vand.u32 %v100, 4294901760
    %v2747 = vsub.f32 %v100, %v2746
    %2748 = vmatpush.msra.mxu0 %v2747
    %v2749 = vand.u32 %v98, 4294901760
    %v2750 = vsub.f32 %v98, %v2749
    %2751 = vmatpush.msra.mxu0 %v2750
    %v2752 = vand.u32 %v96, 4294901760
    %v2753 = vsub.f32 %v96, %v2752
    %2754 = vmatpush.msra.mxu0 %v2753
    %v2755 = vand.u32 %v94, 4294901760
    %v2756 = vsub.f32 %v94, %v2755
    %2757 = vmatpush.msra.mxu0 %v2756
    %v2758 = vand.u32 %v92, 4294901760
    %v2759 = vsub.f32 %v92, %v2758
    %2760 = vmatpush.msra.mxu0 %v2759
    %v2761 = vand.u32 %v90, 4294901760
    %v2762 = vsub.f32 %v90, %v2761
    %2763 = vmatpush.msra.mxu0 %v2762
    %v2764 = vand.u32 %v88, 4294901760
    %v2765 = vsub.f32 %v88, %v2764
    %2766 = vmatpush.msra.mxu0 %v2765
    %v2767 = vand.u32 %v86, 4294901760
    %v2768 = vsub.f32 %v86, %v2767
    %2769 = vmatpush.msra.mxu0 %v2768
    %v2770 = vand.u32 %v1554, 4294901760
    %v2771 = vsub.f32 %v1554, %v2770
    %2772 = vmatmul.f32.gmra.mxu0 %v2771
    %v2773 = vpop.f32.mrf.mxu0
    %v2774 = vadd.f32 %v2720, %v2773
    %2775 = vdwg.mxu0
    %v2776 = vand.u32 %v116, 4294901760
    %2777 = vmatpush.msra.mxu0 %v2776
    %v2778 = vand.u32 %v114, 4294901760
    %2779 = vmatpush.msra.mxu0 %v2778
    %v2780 = vand.u32 %v112, 4294901760
    %2781 = vmatpush.msra.mxu0 %v2780
    %v2782 = vand.u32 %v110, 4294901760
    %2783 = vmatpush.msra.mxu0 %v2782
    %v2784 = vand.u32 %v108, 4294901760
    %2785 = vmatpush.msra.mxu0 %v2784
    %v2786 = vand.u32 %v106, 4294901760
    %2787 = vmatpush.msra.mxu0 %v2786
    %v2788 = vand.u32 %v104, 4294901760
    %2789 = vmatpush.msra.mxu0 %v2788
    %v2790 = vand.u32 %v102, 4294901760
    %2791 = vmatpush.msra.mxu0 %v2790
    %v2792 = vand.u32 %v100, 4294901760
    %2793 = vmatpush.msra.mxu0 %v2792
    %v2794 = vand.u32 %v98, 4294901760
    %2795 = vmatpush.msra.mxu0 %v2794
    %v2796 = vand.u32 %v96, 4294901760
    %2797 = vmatpush.msra.mxu0 %v2796
    %v2798 = vand.u32 %v94, 4294901760
    %2799 = vmatpush.msra.mxu0 %v2798
    %v2800 = vand.u32 %v92, 4294901760
    %2801 = vmatpush.msra.mxu0 %v2800
    %v2802 = vand.u32 %v90, 4294901760
    %2803 = vmatpush.msra.mxu0 %v2802
    %v2804 = vand.u32 %v88, 4294901760
    %2805 = vmatpush.msra.mxu0 %v2804
    %v2806 = vand.u32 %v86, 4294901760
    %2807 = vmatpush.msra.mxu0 %v2806
    %v2808 = vand.u32 %v1554, 4294901760
    %v2809 = vsub.f32 %v1554, %v2808
    %v2810 = vand.u32 %v2809, 4294901760
    %2811 = vmatmul.f32.gmra.mxu0 %v2810
    %v2812 = vpop.f32.mrf.mxu0
    %v2813 = vadd.f32 %v2774, %v2812
    %2814 = vdwg.mxu0
    %v2815 = vand.u32 %v116, 4294901760
    %v2816 = vsub.f32 %v116, %v2815
    %v2817 = vand.u32 %v2816, 4294901760
    %2818 = vmatpush.msra.mxu0 %v2817
    %v2819 = vand.u32 %v114, 4294901760
    %v2820 = vsub.f32 %v114, %v2819
    %v2821 = vand.u32 %v2820, 4294901760
    %2822 = vmatpush.msra.mxu0 %v2821
    %v2823 = vand.u32 %v112, 4294901760
    %v2824 = vsub.f32 %v112, %v2823
    %v2825 = vand.u32 %v2824, 4294901760
    %2826 = vmatpush.msra.mxu0 %v2825
    %v2827 = vand.u32 %v110, 4294901760
    %v2828 = vsub.f32 %v110, %v2827
    %v2829 = vand.u32 %v2828, 4294901760
    %2830 = vmatpush.msra.mxu0 %v2829
    %v2831 = vand.u32 %v108, 4294901760
    %v2832 = vsub.f32 %v108, %v2831
    %v2833 = vand.u32 %v2832, 4294901760
    %2834 = vmatpush.msra.mxu0 %v2833
    %v2835 = vand.u32 %v106, 4294901760
    %v2836 = vsub.f32 %v106, %v2835
    %v2837 = vand.u32 %v2836, 4294901760
    %2838 = vmatpush.msra.mxu0 %v2837
    %v2839 = vand.u32 %v104, 4294901760
    %v2840 = vsub.f32 %v104, %v2839
    %v2841 = vand.u32 %v2840, 4294901760
    %2842 = vmatpush.msra.mxu0 %v2841
    %v2843 = vand.u32 %v102, 4294901760
    %v2844 = vsub.f32 %v102, %v2843
    %v2845 = vand.u32 %v2844, 4294901760
    %2846 = vmatpush.msra.mxu0 %v2845
    %v2847 = vand.u32 %v100, 4294901760
    %v2848 = vsub.f32 %v100, %v2847
    %v2849 = vand.u32 %v2848, 4294901760
    %2850 = vmatpush.msra.mxu0 %v2849
    %v2851 = vand.u32 %v98, 4294901760
    %v2852 = vsub.f32 %v98, %v2851
    %v2853 = vand.u32 %v2852, 4294901760
    %2854 = vmatpush.msra.mxu0 %v2853
    %v2855 = vand.u32 %v96, 4294901760
    %v2856 = vsub.f32 %v96, %v2855
    %v2857 = vand.u32 %v2856, 4294901760
    %2858 = vmatpush.msra.mxu0 %v2857
    %v2859 = vand.u32 %v94, 4294901760
    %v2860 = vsub.f32 %v94, %v2859
    %v2861 = vand.u32 %v2860, 4294901760
    %2862 = vmatpush.msra.mxu0 %v2861
    %v2863 = vand.u32 %v92, 4294901760
    %v2864 = vsub.f32 %v92, %v2863
    %v2865 = vand.u32 %v2864, 4294901760
    %2866 = vmatpush.msra.mxu0 %v2865
    %v2867 = vand.u32 %v90, 4294901760
    %v2868 = vsub.f32 %v90, %v2867
    %v2869 = vand.u32 %v2868, 4294901760
    %2870 = vmatpush.msra.mxu0 %v2869
    %v2871 = vand.u32 %v88, 4294901760
    %v2872 = vsub.f32 %v88, %v2871
    %v2873 = vand.u32 %v2872, 4294901760
    %2874 = vmatpush.msra.mxu0 %v2873
    %v2875 = vand.u32 %v86, 4294901760
    %v2876 = vsub.f32 %v86, %v2875
    %v2877 = vand.u32 %v2876, 4294901760
    %2878 = vmatpush.msra.mxu0 %v2877
    %v2879 = vand.u32 %v1554, 4294901760
    %2880 = vmatmul.f32.gmra.mxu0 %v2879
    %v2881 = vpop.f32.mrf.mxu0
    %v2882 = vadd.f32 %v2813, %v2881
    %2883 = vdwg.mxu0
    %v2884 = vand.u32 %v116, 4294901760
    %2885 = vmatpush.msra.mxu0 %v2884
    %v2886 = vand.u32 %v114, 4294901760
    %2887 = vmatpush.msra.mxu0 %v2886
    %v2888 = vand.u32 %v112, 4294901760
    %2889 = vmatpush.msra.mxu0 %v2888
    %v2890 = vand.u32 %v110, 4294901760
    %2891 = vmatpush.msra.mxu0 %v2890
    %v2892 = vand.u32 %v108, 4294901760
    %2893 = vmatpush.msra.mxu0 %v2892
    %v2894 = vand.u32 %v106, 4294901760
    %2895 = vmatpush.msra.mxu0 %v2894
    %v2896 = vand.u32 %v104, 4294901760
    %2897 = vmatpush.msra.mxu0 %v2896
    %v2898 = vand.u32 %v102, 4294901760
    %2899 = vmatpush.msra.mxu0 %v2898
    %v2900 = vand.u32 %v100, 4294901760
    %2901 = vmatpush.msra.mxu0 %v2900
    %v2902 = vand.u32 %v98, 4294901760
    %2903 = vmatpush.msra.mxu0 %v2902
    %v2904 = vand.u32 %v96, 4294901760
    %2905 = vmatpush.msra.mxu0 %v2904
    %v2906 = vand.u32 %v94, 4294901760
    %2907 = vmatpush.msra.mxu0 %v2906
    %v2908 = vand.u32 %v92, 4294901760
    %2909 = vmatpush.msra.mxu0 %v2908
    %v2910 = vand.u32 %v90, 4294901760
    %2911 = vmatpush.msra.mxu0 %v2910
    %v2912 = vand.u32 %v88, 4294901760
    %2913 = vmatpush.msra.mxu0 %v2912
    %v2914 = vand.u32 %v86, 4294901760
    %2915 = vmatpush.msra.mxu0 %v2914
    %v2916 = vand.u32 %v1554, 4294901760
    %2917 = vmatmul.f32.gmra.mxu0 %v2916
    %v2918 = vpop.f32.mrf.mxu0
    %v2919 = vadd.f32 %v2882, %v2918
    %2920 = vdwg.mxu0
    %v2921 = vxor.u32 %v2237, 2147483648
    %v2922 = vxor.u32 %v2919, 2147483648
    %v2923 = vmul.f32 %v2921, 1.442695
    %v2924 = vpow.pop %v2923
    %v2925 = vmul.f32 %v2922, 1.442695
    %v2926 = vpow.pop %v2925
    %v2927 = vadd.f32 %v2924, 1.0
    %v2928 = vadd.f32 %v2926, 1.0
    %v2929 = vrcp.pop %v2927
    %v2930 = vmul.f32 %v2927, %v2929
    %v2931 = vsub.f32 1.0, %v2930
    %v2932 = vmul.f32 %v2929, %v2931
    %v2933 = vadd.f32 %v2929, %v2932
    %vm2934 = vweird.f32 %v2927
    %vm2935 = vweird.f32 %v2929
    %vm2936 = vmor %vm2934, %vm2935
    %v2937 = vsel %vm2936, %v2929, %v2933
    %v2938 = vand.u32 2147483647, %v2927
    %vm2939 = vcmp.eq.f32.partialorder %v2938, 8.507059e+37
    %v2940 = vand.u32 %v2927, 2147483648
    %v2941 = vor.u32 1.1754944e-38, %v2940
    %v2942 = vsel %vm2939, %v2941, %v2937
    %v2943 = vmul.f32 1.0, %v2942
    %v2944 = vrcp.pop %v2928
    %v2945 = vmul.f32 %v2928, %v2944
    %v2946 = vsub.f32 1.0, %v2945
    %v2947 = vmul.f32 %v2944, %v2946
    %v2948 = vadd.f32 %v2944, %v2947
    %vm2949 = vweird.f32 %v2928
    %vm2950 = vweird.f32 %v2944
    %vm2951 = vmor %vm2949, %vm2950
    %v2952 = vsel %vm2951, %v2944, %v2948
    %v2953 = vand.u32 2147483647, %v2928
    %vm2954 = vcmp.eq.f32.partialorder %v2953, 8.507059e+37
    %v2955 = vand.u32 %v2928, 2147483648
    %v2956 = vor.u32 1.1754944e-38, %v2955
    %v2957 = vsel %vm2954, %v2956, %v2952
    %v2958 = vmul.f32 1.0, %v2957
    %v2961 = vrot.slane %v2958, 6
    %vm2962 = vcmask 1041408
    %v2963 = vsel %vm2962, %v2943, %v2961
    %2965 = vst [vmem:[#allocation7] sm:$0xf] %v2963
    // Predicated region
    $region18: #{tpu_custom_call.1} parent=1 // pred_check
      _
    $region19: #{tpu_custom_call.1} parent=1 // pred_check_branch
      %2967 = sbr.rel (0) target = $region21
    $region20: #{tpu_custom_call.1} parent=1 // pred_region
      %2969 = vsyncadd [#allocation4], 0
      %s2971 = sshll.u32 [#allocation7], 4
      %s2972 = int_to_ptr.vmem [resolvable:$true] %s2971
      %s2973 = sshll.u32 %s2, 4
      %s2974 = int_to_ptr.hbm [resolvable:$true] %s2973
      %2976 = dma.vmem_to_hbm [thread:$0]  %s2972, 64, %s2974, [#allocation4]
    $region21: #{tpu_custom_call.1} parent=1 // pred_fallthru
      _
    // Predicated region
    $region22: #{tpu_custom_call.1} parent=1 // pred_check
      _
    $region23: #{tpu_custom_call.1} parent=1 // pred_check_branch
      %2978 = sbr.rel (0) target = $region25
    $region24: #{tpu_custom_call.1} parent=1 // pred_region
      %2980 = dma.done [#allocation4], 64
    $region25: #{tpu_custom_call.1} parent=1 // pred_fallthru
      _
    %2981 = vsyncpa [#allocation3], 1
    %2982 = vsyncpa [#allocation6], 1
    %2983 = vsyncpa [#allocation4], 1

</llo_original>
